<compile_context>
chip_gen: v6e
topology: v6e:2x2x1
jax: 0.10.0
libtpu: 0.0.40
codegen_flags: <defaults>
</compile_context>

<pallas_src>
import functools
import jax
import jax.numpy as jnp
from jax.experimental import pallas as pl
from jax.experimental.pallas import tpu as pltpu

EPS = 1e-5      # PyTorch BatchNorm3d default eps
LANE = 1024     # lane-tile width for the flat [C, M] layout kernels


def round_up(x, m):
    return ((x + m - 1) // m) * m


def _elu(y):
    # ELU(alpha=1): y if y > 0 else exp(y) - 1  (clamp exp arg for safety)
    return jnp.where(y > 0, y, jnp.exp(jnp.minimum(y, 0.0)) - 1.0)


# --------------------------------------------------------------------------
# down_conv matmul (transposed) + fused BatchNorm partial statistics
# --------------------------------------------------------------------------
def _mm_stats_kernel(a_ref, w_ref, b_ref, y_ref, ps_ref, pq_ref):
    y = jnp.dot(w_ref[...], a_ref[...], preferred_element_type=jnp.float32)
    y = y + b_ref[...]
    y_ref[...] = y
    # per-tile partial sums over lanes -> (Cout, 1), one row-block per step
    ps_ref[0] = jnp.sum(y, axis=1, keepdims=True)
    pq_ref[0] = jnp.sum(y * y, axis=1, keepdims=True)


def matmul_t_stats(cols_t, w_t, bias, tn):
    """y[Cout, Mp] = w_t[Cout, K] @ cols_t[K, Mp] + bias, plus per-tile
    partial sum / sum-of-squares (for training-mode BatchNorm)."""
    K, Mp = cols_t.shape
    Co = w_t.shape[0]
    G = Mp // tn
    return pl.pallas_call(
        _mm_stats_kernel,
        out_shape=(jax.ShapeDtypeStruct((Co, Mp), jnp.float32),
                   jax.ShapeDtypeStruct((G, Co, 1), jnp.float32),
                   jax.ShapeDtypeStruct((G, Co, 1), jnp.float32)),
        grid_spec=pltpu.PrefetchScalarGridSpec(
            num_scalar_prefetch=0,
            grid=(G,),
            in_specs=[
                pl.BlockSpec((K, tn), lambda i: (0, i)),
                pl.BlockSpec((Co, K), lambda i: (0, 0)),
                pl.BlockSpec((Co, 1), lambda i: (0, 0)),
            ],
            out_specs=(
                pl.BlockSpec((Co, tn), lambda i: (0, i)),
                pl.BlockSpec((1, Co, 1), lambda i: (i, 0, 0)),
                pl.BlockSpec((1, Co, 1), lambda i: (i, 0, 0)),
            ),
        ),
        compiler_params=pltpu.CompilerParams(dimension_semantics=("parallel",)),
    )(cols_t, w_t, bias)


# --------------------------------------------------------------------------
# Direct 5x5x5 conv (stride 1, pad 2) + bias + fused BN partial statistics
#
# Layout trick: each padded (H, W) plane is flattened to a single lane axis
# (flat index h*Wp + w).  For a kernel offset (kh, kw) the required input for
# ALL output positions is then a single contiguous lane slice starting at
# kh*Wp + kw, so the 25 windows are plain VMEM copies into a patch matrix.
# Output lanes t = ho*Wp + wo' with wo' >= Wo are junk and cropped in glue
# (and masked out of the BN statistics in-kernel).  The depth offset kd is a
# reduction grid axis: the input BlockSpec picks plane (do + kd).
# --------------------------------------------------------------------------
def _luconv_kernel(x_ref, w_ref, b_ref, y_ref, ps_ref, pq_ref,
                   patch_ref, acc_ref, *, C, Wp, Wo, Ho, Lout):
    kd = pl.program_id(2)

    # Build the (kh, kw) patch matrix for this depth offset entirely in VMEM.
    for kh in range(5):
        for kw in range(5):
            r0 = (kh * 5 + kw) * C
            off = kh * Wp + kw
            patch_ref[r0:r0 + C, :] = x_ref[0, 0, :, off:off + Lout]

    @pl.when(kd == 0)
    def _():
        acc_ref[...] = jnp.broadcast_to(b_ref[...], (C, Lout))

    acc_ref[...] += jnp.dot(w_ref[0], patch_ref[...],
                            preferred_element_type=jnp.float32)

    @pl.when(kd == pl.num_programs(2) - 1)
    def _():
        acc = acc_ref[...]
        y_ref[0, 0] = acc
        # mask junk columns (wo >= Wo, or beyond Ho*Wp) out of the BN stats
        lane = jax.lax.broadcasted_iota(jnp.int32, (C, Lout), 1)
        valid = ((lane % Wp) < Wo) & (lane < Ho * Wp)
        am = jnp.where(valid, acc, 0.0)
        ps_ref[0, 0] = jnp.sum(am, axis=1, keepdims=True)
        pq_ref[0, 0] = jnp.sum(am * am, axis=1, keepdims=True)


def luconv_conv(x_flat, w, b, *, Ho, Wo, Lout):
    """x_flat: [N, Dp, C, Lin] padded planes.  w: [5, Cout, 25*Cin] (K order =
    (kh, kw, cin)).  Returns y [N, Do, Cout, Lout] plus per-plane BN partials."""
    N, Dp, C, Lin = x_flat.shape
    Do = Dp - 4
    Wp = Wo + 4
    kernel = functools.partial(_luconv_kernel, C=C, Wp=Wp, Wo=Wo, Ho=Ho, Lout=Lout)
    return pl.pallas_call(
        kernel,
        out_shape=(jax.ShapeDtypeStruct((N, Do, C, Lout), jnp.float32),
                   jax.ShapeDtypeStruct((N, Do, C, 1), jnp.float32),
                   jax.ShapeDtypeStruct((N, Do, C, 1), jnp.float32)),
        grid_spec=pltpu.PrefetchScalarGridSpec(
            num_scalar_prefetch=0,
            grid=(N, Do, 5),
            in_specs=[
                pl.BlockSpec((1, 1, C, Lin), lambda n, d, kd: (n, d + kd, 0, 0)),
                pl.BlockSpec((1, C, 25 * C), lambda n, d, kd: (kd, 0, 0)),
                pl.BlockSpec((C, 1), lambda n, d, kd: (0, 0)),
            ],
            out_specs=(
                pl.BlockSpec((1, 1, C, Lout), lambda n, d, kd: (n, d, 0, 0)),
                pl.BlockSpec((1, 1, C, 1), lambda n, d, kd: (n, d, 0, 0)),
                pl.BlockSpec((1, 1, C, 1), lambda n, d, kd: (n, d, 0, 0)),
            ),
            scratch_shapes=[
                pltpu.VMEM((25 * C, Lout), jnp.float32),   # patch matrix
                pltpu.VMEM((C, Lout), jnp.float32),        # f32 accumulator
            ],
        ),
        compiler_params=pltpu.CompilerParams(
            dimension_semantics=("parallel", "parallel", "arbitrary")),
    )(x_flat, w, b)


# --------------------------------------------------------------------------
# Fused BatchNorm-apply (precomputed scale/shift) + ELU ; residual add + ELU
# --------------------------------------------------------------------------
def _bn_act_kernel(x_ref, s_ref, t_ref, o_ref):
    o_ref[...] = _elu(x_ref[...] * s_ref[...] + t_ref[...])


def scale_shift_elu(x3, scale, shift, tl):
    """elu(x * scale + shift), per-channel scale/shift.  x3: [G, C, L]."""
    G, C, L = x3.shape
    return pl.pallas_call(
        _bn_act_kernel,
        out_shape=jax.ShapeDtypeStruct((G, C, L), jnp.float32),
        grid_spec=pltpu.PrefetchScalarGridSpec(
            num_scalar_prefetch=0,
            grid=(G, L // tl),
            in_specs=[
                pl.BlockSpec((1, C, tl), lambda g, i: (g, 0, i)),
                pl.BlockSpec((C, 1), lambda g, i: (0, 0)),
                pl.BlockSpec((C, 1), lambda g, i: (0, 0)),
            ],
            out_specs=pl.BlockSpec((1, C, tl), lambda g, i: (g, 0, i)),
        ),
        compiler_params=pltpu.CompilerParams(
            dimension_semantics=("parallel", "parallel")),
    )(x3, scale, shift)


def _add_act_kernel(a_ref, r_ref, o_ref):
    o_ref[...] = _elu(a_ref[...] + r_ref[...])


def add_elu(a2, r2, tn):
    C, Mp = a2.shape
    return pl.pallas_call(
        _add_act_kernel,
        out_shape=jax.ShapeDtypeStruct((C, Mp), jnp.float32),
        grid_spec=pltpu.PrefetchScalarGridSpec(
            num_scalar_prefetch=0,
            grid=(Mp // tn,),
            in_specs=[pl.BlockSpec((C, tn), lambda i: (0, i)),
                      pl.BlockSpec((C, tn), lambda i: (0, i))],
            out_specs=pl.BlockSpec((C, tn), lambda i: (0, i)),
        ),
        compiler_params=pltpu.CompilerParams(dimension_semantics=("parallel",)),
    )(a2, r2)


# --------------------------------------------------------------------------
# glue (plain JAX): BN affine precompute, LUConv block, full forward
# --------------------------------------------------------------------------
def bn_affine(s_tot, q_tot, count, gamma, beta):
    mean = s_tot / count
    var = jnp.maximum(q_tot / count - mean * mean, 0.0)   # clamp f32 cancellation
    scale = gamma / jnp.sqrt(var + EPS)
    shift = beta - mean * scale
    return scale.reshape(-1, 1), shift.reshape(-1, 1)


def lu_conv(a5, w, b, gamma, beta):
    """One LUConv: elu(bn(conv5x5x5(x))) with training-mode batch statistics.
    a5: [N, D, C, H, W] (channels-middle); returns the same layout."""
    N, D, C, H, W = a5.shape
    Hp, Wp = H + 4, W + 4
    Lout = round_up(H * Wp, 128)
    Lin = round_up(4 * Wp + 4 + Lout, 128)

    xp = jnp.pad(a5, ((0, 0), (2, 2), (0, 0), (2, 2), (2, 2)))     # [N,Dp,C,Hp,Wp]
    x_flat = xp.reshape(N, D + 4, C, Hp * Wp)
    x_flat = jnp.pad(x_flat, ((0, 0), (0, 0), (0, 0), (0, Lin - Hp * Wp)))

    y4, ps, pq = luconv_conv(x_flat, w, b, Ho=H, Wo=W, Lout=Lout)

    count = N * D * H * W
    scale, shift = bn_affine(jnp.sum(ps, axis=(0, 1, 3)),
                             jnp.sum(pq, axis=(0, 1, 3)), count, gamma, beta)
    o3 = scale_shift_elu(y4.reshape(N * D, C, Lout), scale, shift, Lout)
    o = o3.reshape(N, D, C, Lout)[..., :H * Wp]
    o = o.reshape(N, D, C, H, Wp)[..., :W]                         # crop junk cols
    return o


def init_params(key, in_chans, n_convs):
    """Deterministic synthetic parameters in the layouts the kernels use."""
    out_chans = 2 * in_chans
    keys = jax.random.split(key, 2 + 2 * n_convs)
    params = {}
    # down_conv: Conv3d(inChans, outChans, kernel_size=2, stride=2) (+ bias)
    params["down_w"] = 0.1 * jax.random.normal(
        keys[0], (out_chans, 8 * in_chans), jnp.float32)        # K order (kd,kh,kw,cin)
    params["down_b"] = 0.1 * jax.random.normal(
        keys[1], (out_chans, 1), jnp.float32)
    params["down_gamma"] = jnp.ones((out_chans,), jnp.float32)
    params["down_beta"] = jnp.zeros((out_chans,), jnp.float32)
    # LUConv: Conv3d(outChans, outChans, kernel_size=5, padding=2) + BN
    lu = []
    for i in range(n_convs):
        w = 0.05 * jax.random.normal(
            keys[2 + 2 * i], (5, out_chans, 25 * out_chans), jnp.float32)
        bb = 0.05 * jax.random.normal(
            keys[3 + 2 * i], (out_chans, 1), jnp.float32)
        lu.append(dict(w=w, b=bb,
                       gamma=jnp.ones((out_chans,), jnp.float32),
                       beta=jnp.zeros((out_chans,), jnp.float32)))
    params["luconvs"] = lu
    return params


def down_transition_forward(x_ncdhw, params):
    """DownTransition.forward.  Input NCDHW, output NCDHW (2x channels, /2 spatial)."""
    x = x_ncdhw.astype(jnp.float32)
    N, Cin, D, H, W = x.shape
    Co = 2 * Cin
    Do, Ho, Wo = D // 2, H // 2, W // 2
    M1 = N * Do * Ho * Wo
    M1p = round_up(M1, LANE)

    # ---- down = relu1(bn1(down_conv(x))) ------------------------------------
    # im2col for k=2/stride-2 is a pure permutation (no expansion) -> glue.
    xr = x[:, :, :2 * Do, :2 * Ho, :2 * Wo].reshape(N, Cin, Do, 2, Ho, 2, Wo, 2)
    cols_t = xr.transpose(3, 5, 7, 1, 0, 2, 4, 6).reshape(8 * Cin, M1)
    cols_t = jnp.pad(cols_t, ((0, 0), (0, M1p - M1)))

    y, ps, pq = matmul_t_stats(cols_t, params["down_w"], params["down_b"], LANE)

    npad = M1p - M1                      # zero-pad columns produce exactly `bias`
    b0 = params["down_b"][:, 0]
    scale, shift = bn_affine(jnp.sum(ps, axis=(0, 2)) - npad * b0,
                             jnp.sum(pq, axis=(0, 2)) - npad * b0 * b0,
                             M1, params["down_gamma"], params["down_beta"])
    down2 = scale_shift_elu(y.reshape(1, Co, M1p), scale, shift, LANE)
    down2 = down2.reshape(Co, M1p)

    # ---- do1 = passthrough (dropout=False); ops = nConvs x LUConv -----------
    a5 = down2[:, :M1].reshape(Co, N, Do, Ho, Wo).transpose(1, 2, 0, 3, 4)
    for p in params["luconvs"]:
        a5 = lu_conv(a5, p["w"], p["b"], p["gamma"], p["beta"])

    # ---- out += down; out = relu2(out) --------------------------------------
    out2 = a5.transpose(2, 0, 1, 3, 4).reshape(Co, M1)
    out2 = jnp.pad(out2, ((0, 0), (0, M1p - M1)))
    out2 = add_elu(out2, down2, LANE)

    out = out2[:, :M1].reshape(Co, N, Do, Ho, Wo)
    return out.transpose(1, 0, 2, 3, 4)   # back to NCDHW


if __name__ == "__main__":
    # Small config: inChans=4, nConvs=2, elu=True, dropout=False
    in_chans, n_convs = 4, 2
    key = jax.random.PRNGKey(0)
    kx, kp = jax.random.split(key)
    x = jax.random.normal(kx, (2, in_chans, 8, 8, 8), jnp.float32)  # NCDHW
    params = init_params(kp, in_chans, n_convs)

    fwd = jax.jit(functools.partial(down_transition_forward, params=params))
    y = fwd(x)
    jax.block_until_ready(y)
    assert y.shape == (2, 2 * in_chans, 4, 4, 4), y.shape
    print("KERNEL_OK")
</pallas_src>

<mosaic_0001>
module attributes {stable_mosaic.version = 11 : i64} {
  func.func @_mm_stats_kernel(%arg0: i32, %arg1: memref<32x1024xf32, #tpu.memory_space<vmem>>, %arg2: memref<8x32xf32, #tpu.memory_space<vmem>>, %arg3: memref<8x1xf32, #tpu.memory_space<vmem>>, %arg4: memref<8x1024xf32, #tpu.memory_space<vmem>>, %arg5: memref<1x8x1xf32, #tpu.memory_space<vmem>>, %arg6: memref<1x8x1xf32, #tpu.memory_space<vmem>>) attributes {dimension_semantics = [#tpu.dimension_semantics<parallel>], iteration_bounds = array<i64: 1>, scalar_prefetch = 0 : i64, scratch_operands = 0 : i64, tpu.core_type = #tpu.core_type<tc>, window_params = [{transform_indices = @transform_0, window_bounds = array<i64: 32, 1024>}, {pipeline_mode = #tpu.pipeline_mode<synchronous>, transform_indices = @transform_1, window_bounds = array<i64: 8, 32>}, {pipeline_mode = #tpu.pipeline_mode<synchronous>, transform_indices = @transform_2, window_bounds = array<i64: 8, 1>}, {transform_indices = @transform_3, window_bounds = array<i64: 8, 1024>}, {transform_indices = @transform_4, window_bounds = array<i64: 1, 8, 1>}, {transform_indices = @transform_5, window_bounds = array<i64: 1, 8, 1>}]} {
    %c0 = arith.constant 0 : index
    %c0_0 = arith.constant 0 : index
    %0 = vector.load %arg2[%c0, %c0_0] : memref<8x32xf32, #tpu.memory_space<vmem>>, vector<8x32xf32>
    %c0_1 = arith.constant 0 : index
    %c0_2 = arith.constant 0 : index
    %1 = vector.load %arg1[%c0_1, %c0_2] : memref<32x1024xf32, #tpu.memory_space<vmem>>, vector<32x1024xf32>
    %cst = arith.constant dense<0.000000e+00> : vector<8x1024xf32>
    %2 = tpu.matmul %0, %1, %cst {dimension_numbers = #tpu.dot_dimension_numbers<[1], [0], [0], [1], [0, 0, 1, 1], [], []>} : vector<8x32xf32>, vector<32x1024xf32>, vector<8x1024xf32> -> vector<8x1024xf32>
    %c0_3 = arith.constant 0 : index
    %c0_4 = arith.constant 0 : index
    %3 = vector.load %arg3[%c0_3, %c0_4] : memref<8x1xf32, #tpu.memory_space<vmem>>, vector<8x1xf32>
    %4 = vector.broadcast %3 : vector<8x1xf32> to vector<8x1024xf32>
    %5 = arith.addf %2, %4 : vector<8x1024xf32>
    %c0_5 = arith.constant 0 : index
    %c0_6 = arith.constant 0 : index
    %6 = vector.load %arg4[%c0_5, %c0_6] : memref<8x1024xf32, #tpu.memory_space<vmem>>, vector<8x1024xf32>
    tpu.vector_store %arg4[%c0_5, %c0_6], %5 {strides = array<i32>} : memref<8x1024xf32, #tpu.memory_space<vmem>>, vector<8x1024xf32>,
    %cst_7 = arith.constant dense<0.000000e+00> : vector<8xf32>
    %7 = vector.multi_reduction <add>, %5, %cst_7 [1] : vector<8x1024xf32> to vector<8xf32>
    %8 = vector.shape_cast %7 : vector<8xf32> to vector<8x1xf32>
    %c0_8 = arith.constant 0 : index
    %c0_9 = arith.constant 0 : index
    %c0_10 = arith.constant 0 : index
    %9 = vector.load %arg5[%c0_8, %c0_9, %c0_10] : memref<1x8x1xf32, #tpu.memory_space<vmem>>, vector<1x8x1xf32>
    %10 = vector.shape_cast %9 : vector<1x8x1xf32> to vector<8x1xf32>
    %11 = vector.shape_cast %8 : vector<8x1xf32> to vector<1x8x1xf32>
    tpu.vector_store %arg5[%c0_8, %c0_9, %c0_10], %11 {strides = array<i32>} : memref<1x8x1xf32, #tpu.memory_space<vmem>>, vector<1x8x1xf32>,
    %12 = arith.mulf %5, %5 : vector<8x1024xf32>
    %cst_11 = arith.constant dense<0.000000e+00> : vector<8xf32>
    %13 = vector.multi_reduction <add>, %12, %cst_11 [1] : vector<8x1024xf32> to vector<8xf32>
    %14 = vector.shape_cast %13 : vector<8xf32> to vector<8x1xf32>
    %c0_12 = arith.constant 0 : index
    %c0_13 = arith.constant 0 : index
    %c0_14 = arith.constant 0 : index
    %15 = vector.load %arg6[%c0_12, %c0_13, %c0_14] : memref<1x8x1xf32, #tpu.memory_space<vmem>>, vector<1x8x1xf32>
    %16 = vector.shape_cast %15 : vector<1x8x1xf32> to vector<8x1xf32>
    %17 = vector.shape_cast %14 : vector<8x1xf32> to vector<1x8x1xf32>
    tpu.vector_store %arg6[%c0_12, %c0_13, %c0_14], %17 {strides = array<i32>} : memref<1x8x1xf32, #tpu.memory_space<vmem>>, vector<1x8x1xf32>,
    return
  }
  func.func @transform_0(%arg0: i32) -> (i32, i32) {
    %c0_i32 = arith.constant 0 : i32
    %c0_i32_0 = arith.constant 0 : i32
    return %c0_i32, %arg0 : i32, i32
  }
  func.func @transform_1(%arg0: i32) -> (i32, i32) {
    %c0_i32 = arith.constant 0 : i32
    %c0_i32_0 = arith.constant 0 : i32
    %c0_i32_1 = arith.constant 0 : i32
    return %c0_i32, %c0_i32_0 : i32, i32
  }
  func.func @transform_2(%arg0: i32) -> (i32, i32) {
    %c0_i32 = arith.constant 0 : i32
    %c0_i32_0 = arith.constant 0 : i32
    %c0_i32_1 = arith.constant 0 : i32
    return %c0_i32, %c0_i32_0 : i32, i32
  }
  func.func @transform_3(%arg0: i32) -> (i32, i32) {
    %c0_i32 = arith.constant 0 : i32
    %c0_i32_0 = arith.constant 0 : i32
    return %c0_i32, %arg0 : i32, i32
  }
  func.func @transform_4(%arg0: i32) -> (i32, i32, i32) {
    %c0_i32 = arith.constant 0 : i32
    %c0_i32_0 = arith.constant 0 : i32
    %c0_i32_1 = arith.constant 0 : i32
    return %arg0, %c0_i32, %c0_i32_0 : i32, i32, i32
  }
  func.func @transform_5(%arg0: i32) -> (i32, i32, i32) {
    %c0_i32 = arith.constant 0 : i32
    %c0_i32_0 = arith.constant 0 : i32
    %c0_i32_1 = arith.constant 0 : i32
    return %arg0, %c0_i32, %c0_i32_0 : i32, i32, i32
  }
}

module attributes {stable_mosaic.version = 11 : i64} {
  func.func @_bn_act_kernel(%arg0: i32, %arg1: i32, %arg2: memref<1x8x1024xf32, #tpu.memory_space<vmem>>, %arg3: memref<8x1xf32, #tpu.memory_space<vmem>>, %arg4: memref<8x1xf32, #tpu.memory_space<vmem>>, %arg5: memref<1x8x1024xf32, #tpu.memory_space<vmem>>) attributes {dimension_semantics = [#tpu.dimension_semantics<parallel>, #tpu.dimension_semantics<parallel>], iteration_bounds = array<i64: 1, 1>, scalar_prefetch = 0 : i64, scratch_operands = 0 : i64, tpu.core_type = #tpu.core_type<tc>, window_params = [{transform_indices = @transform_0, window_bounds = array<i64: 1, 8, 1024>}, {pipeline_mode = #tpu.pipeline_mode<synchronous>, transform_indices = @transform_1, window_bounds = array<i64: 8, 1>}, {pipeline_mode = #tpu.pipeline_mode<synchronous>, transform_indices = @transform_2, window_bounds = array<i64: 8, 1>}, {transform_indices = @transform_3, window_bounds = array<i64: 1, 8, 1024>}]} {
    %c0 = arith.constant 0 : index
    %c0_0 = arith.constant 0 : index
    %c0_1 = arith.constant 0 : index
    %0 = vector.load %arg2[%c0, %c0_0, %c0_1] : memref<1x8x1024xf32, #tpu.memory_space<vmem>>, vector<1x8x1024xf32>
    %c0_2 = arith.constant 0 : index
    %c0_3 = arith.constant 0 : index
    %1 = vector.load %arg3[%c0_2, %c0_3] : memref<8x1xf32, #tpu.memory_space<vmem>>, vector<8x1xf32>
    %2 = vector.shape_cast %1 : vector<8x1xf32> to vector<1x8x1xf32>
    %3 = vector.broadcast %2 : vector<1x8x1xf32> to vector<1x8x1024xf32>
    %4 = arith.mulf %0, %3 : vector<1x8x1024xf32>
    %c0_4 = arith.constant 0 : index
    %c0_5 = arith.constant 0 : index
    %5 = vector.load %arg4[%c0_4, %c0_5] : memref<8x1xf32, #tpu.memory_space<vmem>>, vector<8x1xf32>
    %6 = vector.shape_cast %5 : vector<8x1xf32> to vector<1x8x1xf32>
    %7 = vector.broadcast %6 : vector<1x8x1xf32> to vector<1x8x1024xf32>
    %8 = arith.addf %4, %7 : vector<1x8x1024xf32>
    %cst = arith.constant 0.000000e+00 : f32
    %9 = vector.broadcast %cst : f32 to vector<1x8x1024xf32>
    %10 = arith.cmpf ogt, %8, %9 : vector<1x8x1024xf32>
    %cst_6 = arith.constant 0.000000e+00 : f32
    %11 = vector.broadcast %cst_6 : f32 to vector<1x8x1024xf32>
    %12 = arith.minimumf %8, %11 : vector<1x8x1024xf32>
    %13 = math.exp %12 : vector<1x8x1024xf32>
    %cst_7 = arith.constant 1.000000e+00 : f32
    %14 = vector.broadcast %cst_7 : f32 to vector<1x8x1024xf32>
    %15 = arith.subf %13, %14 : vector<1x8x1024xf32>
    %16 = arith.select %10, %8, %15 : vector<1x8x1024xi1>, vector<1x8x1024xf32>
    %c0_8 = arith.constant 0 : index
    %c0_9 = arith.constant 0 : index
    %c0_10 = arith.constant 0 : index
    %17 = vector.load %arg5[%c0_8, %c0_9, %c0_10] : memref<1x8x1024xf32, #tpu.memory_space<vmem>>, vector<1x8x1024xf32>
    tpu.vector_store %arg5[%c0_8, %c0_9, %c0_10], %16 {strides = array<i32>} : memref<1x8x1024xf32, #tpu.memory_space<vmem>>, vector<1x8x1024xf32>,
    return
  }
  func.func @transform_0(%arg0: i32, %arg1: i32) -> (i32, i32, i32) {
    %c0_i32 = arith.constant 0 : i32
    %c0_i32_0 = arith.constant 0 : i32
    return %arg0, %c0_i32, %arg1 : i32, i32, i32
  }
  func.func @transform_1(%arg0: i32, %arg1: i32) -> (i32, i32) {
    %c0_i32 = arith.constant 0 : i32
    %c0_i32_0 = arith.constant 0 : i32
    %c0_i32_1 = arith.constant 0 : i32
    return %c0_i32, %c0_i32_0 : i32, i32
  }
  func.func @transform_2(%arg0: i32, %arg1: i32) -> (i32, i32) {
    %c0_i32 = arith.constant 0 : i32
    %c0_i32_0 = arith.constant 0 : i32
    %c0_i32_1 = arith.constant 0 : i32
    return %c0_i32, %c0_i32_0 : i32, i32
  }
  func.func @transform_3(%arg0: i32, %arg1: i32) -> (i32, i32, i32) {
    %c0_i32 = arith.constant 0 : i32
    %c0_i32_0 = arith.constant 0 : i32
    return %arg0, %c0_i32, %arg1 : i32, i32, i32
  }
}

module attributes {stable_mosaic.version = 11 : i64} {
  func.func @_luconv_kernel(%arg0: i32, %arg1: i32, %arg2: i32, %arg3: memref<1x1x8x256xf32, #tpu.memory_space<vmem>>, %arg4: memref<1x8x200xf32, #tpu.memory_space<vmem>>, %arg5: memref<8x1xf32, #tpu.memory_space<vmem>>, %arg6: memref<1x1x8x128xf32, #tpu.memory_space<vmem>>, %arg7: memref<1x1x8x1xf32, #tpu.memory_space<vmem>>, %arg8: memref<1x1x8x1xf32, #tpu.memory_space<vmem>>, %arg9: memref<200x128xf32, #tpu.memory_space<vmem>>, %arg10: memref<8x128xf32, #tpu.memory_space<vmem>>) attributes {dimension_semantics = [#tpu.dimension_semantics<parallel>, #tpu.dimension_semantics<parallel>, #tpu.dimension_semantics<arbitrary>], iteration_bounds = array<i64: 2, 4, 5>, scalar_prefetch = 0 : i64, scratch_operands = 2 : i64, tpu.core_type = #tpu.core_type<tc>, window_params = [{transform_indices = @transform_0, window_bounds = array<i64: 1, 1, 8, 256>}, {transform_indices = @transform_1, window_bounds = array<i64: 1, 8, 200>}, {pipeline_mode = #tpu.pipeline_mode<synchronous>, transform_indices = @transform_2, window_bounds = array<i64: 8, 1>}, {transform_indices = @transform_3, window_bounds = array<i64: 1, 1, 8, 128>}, {transform_indices = @transform_4, window_bounds = array<i64: 1, 1, 8, 1>}, {transform_indices = @transform_5, window_bounds = array<i64: 1, 1, 8, 1>}]} {
    %c0 = arith.constant 0 : index
    %c0_0 = arith.constant 0 : index
    %c0_1 = arith.constant 0 : index
    %c0_2 = arith.constant 0 : index
    %0 = vector.load %arg3[%c0, %c0_0, %c0_1, %c0_2] : memref<1x1x8x256xf32, #tpu.memory_space<vmem>>, vector<1x1x8x128xf32>
    %1 = vector.shape_cast %0 : vector<1x1x8x128xf32> to vector<8x128xf32>
    %c0_3 = arith.constant 0 : index
    %c0_4 = arith.constant 0 : index
    %2 = vector.load %arg9[%c0_3, %c0_4] : memref<200x128xf32, #tpu.memory_space<vmem>>, vector<8x128xf32>
    tpu.vector_store %arg9[%c0_3, %c0_4], %1 {strides = array<i32>} : memref<200x128xf32, #tpu.memory_space<vmem>>, vector<8x128xf32>,
    %c0_5 = arith.constant 0 : index
    %c0_6 = arith.constant 0 : index
    %c0_7 = arith.constant 0 : index
    %c1 = arith.constant 1 : index
    %3 = vector.load %arg3[%c0_5, %c0_6, %c0_7, %c1] : memref<1x1x8x256xf32, #tpu.memory_space<vmem>>, vector<1x1x8x128xf32>
    %4 = vector.shape_cast %3 : vector<1x1x8x128xf32> to vector<8x128xf32>
    %c8 = arith.constant 8 : index
    %c0_8 = arith.constant 0 : index
    %5 = vector.load %arg9[%c8, %c0_8] : memref<200x128xf32, #tpu.memory_space<vmem>>, vector<8x128xf32>
    tpu.vector_store %arg9[%c8, %c0_8], %4 {strides = array<i32>} : memref<200x128xf32, #tpu.memory_space<vmem>>, vector<8x128xf32>,
    %c0_9 = arith.constant 0 : index
    %c0_10 = arith.constant 0 : index
    %c0_11 = arith.constant 0 : index
    %c2 = arith.constant 2 : index
    %6 = vector.load %arg3[%c0_9, %c0_10, %c0_11, %c2] : memref<1x1x8x256xf32, #tpu.memory_space<vmem>>, vector<1x1x8x128xf32>
    %7 = vector.shape_cast %6 : vector<1x1x8x128xf32> to vector<8x128xf32>
    %c16 = arith.constant 16 : index
    %c0_12 = arith.constant 0 : index
    %8 = vector.load %arg9[%c16, %c0_12] : memref<200x128xf32, #tpu.memory_space<vmem>>, vector<8x128xf32>
    tpu.vector_store %arg9[%c16, %c0_12], %7 {strides = array<i32>} : memref<200x128xf32, #tpu.memory_space<vmem>>, vector<8x128xf32>,
    %c0_13 = arith.constant 0 : index
    %c0_14 = arith.constant 0 : index
    %c0_15 = arith.constant 0 : index
    %c3 = arith.constant 3 : index
    %9 = vector.load %arg3[%c0_13, %c0_14, %c0_15, %c3] : memref<1x1x8x256xf32, #tpu.memory_space<vmem>>, vector<1x1x8x128xf32>
    %10 = vector.shape_cast %9 : vector<1x1x8x128xf32> to vector<8x128xf32>
    %c24 = arith.constant 24 : index
    %c0_16 = arith.constant 0 : index
    %11 = vector.load %arg9[%c24, %c0_16] : memref<200x128xf32, #tpu.memory_space<vmem>>, vector<8x128xf32>
    tpu.vector_store %arg9[%c24, %c0_16], %10 {strides = array<i32>} : memref<200x128xf32, #tpu.memory_space<vmem>>, vector<8x128xf32>,
    %c0_17 = arith.constant 0 : index
    %c0_18 = arith.constant 0 : index
    %c0_19 = arith.constant 0 : index
    %c4 = arith.constant 4 : index
    %12 = vector.load %arg3[%c0_17, %c0_18, %c0_19, %c4] : memref<1x1x8x256xf32, #tpu.memory_space<vmem>>, vector<1x1x8x128xf32>
    %13 = vector.shape_cast %12 : vector<1x1x8x128xf32> to vector<8x128xf32>
    %c32 = arith.constant 32 : index
    %c0_20 = arith.constant 0 : index
    %14 = vector.load %arg9[%c32, %c0_20] : memref<200x128xf32, #tpu.memory_space<vmem>>, vector<8x128xf32>
    tpu.vector_store %arg9[%c32, %c0_20], %13 {strides = array<i32>} : memref<200x128xf32, #tpu.memory_space<vmem>>, vector<8x128xf32>,
    %c0_21 = arith.constant 0 : index
    %c0_22 = arith.constant 0 : index
    %c0_23 = arith.constant 0 : index
    %c8_24 = arith.constant 8 : index
    %15 = vector.load %arg3[%c0_21, %c0_22, %c0_23, %c8_24] : memref<1x1x8x256xf32, #tpu.memory_space<vmem>>, vector<1x1x8x128xf32>
    %16 = vector.shape_cast %15 : vector<1x1x8x128xf32> to vector<8x128xf32>
    %c40 = arith.constant 40 : index
    %c0_25 = arith.constant 0 : index
    %17 = vector.load %arg9[%c40, %c0_25] : memref<200x128xf32, #tpu.memory_space<vmem>>, vector<8x128xf32>
    tpu.vector_store %arg9[%c40, %c0_25], %16 {strides = array<i32>} : memref<200x128xf32, #tpu.memory_space<vmem>>, vector<8x128xf32>,
    %c0_26 = arith.constant 0 : index
    %c0_27 = arith.constant 0 : index
    %c0_28 = arith.constant 0 : index
    %c9 = arith.constant 9 : index
    %18 = vector.load %arg3[%c0_26, %c0_27, %c0_28, %c9] : memref<1x1x8x256xf32, #tpu.memory_space<vmem>>, vector<1x1x8x128xf32>
    %19 = vector.shape_cast %18 : vector<1x1x8x128xf32> to vector<8x128xf32>
    %c48 = arith.constant 48 : index
    %c0_29 = arith.constant 0 : index
    %20 = vector.load %arg9[%c48, %c0_29] : memref<200x128xf32, #tpu.memory_space<vmem>>, vector<8x128xf32>
    tpu.vector_store %arg9[%c48, %c0_29], %19 {strides = array<i32>} : memref<200x128xf32, #tpu.memory_space<vmem>>, vector<8x128xf32>,
    %c0_30 = arith.constant 0 : index
    %c0_31 = arith.constant 0 : index
    %c0_32 = arith.constant 0 : index
    %c10 = arith.constant 10 : index
    %21 = vector.load %arg3[%c0_30, %c0_31, %c0_32, %c10] : memref<1x1x8x256xf32, #tpu.memory_space<vmem>>, vector<1x1x8x128xf32>
    %22 = vector.shape_cast %21 : vector<1x1x8x128xf32> to vector<8x128xf32>
    %c56 = arith.constant 56 : index
    %c0_33 = arith.constant 0 : index
    %23 = vector.load %arg9[%c56, %c0_33] : memref<200x128xf32, #tpu.memory_space<vmem>>, vector<8x128xf32>
    tpu.vector_store %arg9[%c56, %c0_33], %22 {strides = array<i32>} : memref<200x128xf32, #tpu.memory_space<vmem>>, vector<8x128xf32>,
    %c0_34 = arith.constant 0 : index
    %c0_35 = arith.constant 0 : index
    %c0_36 = arith.constant 0 : index
    %c11 = arith.constant 11 : index
    %24 = vector.load %arg3[%c0_34, %c0_35, %c0_36, %c11] : memref<1x1x8x256xf32, #tpu.memory_space<vmem>>, vector<1x1x8x128xf32>
    %25 = vector.shape_cast %24 : vector<1x1x8x128xf32> to vector<8x128xf32>
    %c64 = arith.constant 64 : index
    %c0_37 = arith.constant 0 : index
    %26 = vector.load %arg9[%c64, %c0_37] : memref<200x128xf32, #tpu.memory_space<vmem>>, vector<8x128xf32>
    tpu.vector_store %arg9[%c64, %c0_37], %25 {strides = array<i32>} : memref<200x128xf32, #tpu.memory_space<vmem>>, vector<8x128xf32>,
    %c0_38 = arith.constant 0 : index
    %c0_39 = arith.constant 0 : index
    %c0_40 = arith.constant 0 : index
    %c12 = arith.constant 12 : index
    %27 = vector.load %arg3[%c0_38, %c0_39, %c0_40, %c12] : memref<1x1x8x256xf32, #tpu.memory_space<vmem>>, vector<1x1x8x128xf32>
    %28 = vector.shape_cast %27 : vector<1x1x8x128xf32> to vector<8x128xf32>
    %c72 = arith.constant 72 : index
    %c0_41 = arith.constant 0 : index
    %29 = vector.load %arg9[%c72, %c0_41] : memref<200x128xf32, #tpu.memory_space<vmem>>, vector<8x128xf32>
    tpu.vector_store %arg9[%c72, %c0_41], %28 {strides = array<i32>} : memref<200x128xf32, #tpu.memory_space<vmem>>, vector<8x128xf32>,
    %c0_42 = arith.constant 0 : index
    %c0_43 = arith.constant 0 : index
    %c0_44 = arith.constant 0 : index
    %c16_45 = arith.constant 16 : index
    %30 = vector.load %arg3[%c0_42, %c0_43, %c0_44, %c16_45] : memref<1x1x8x256xf32, #tpu.memory_space<vmem>>, vector<1x1x8x128xf32>
    %31 = vector.shape_cast %30 : vector<1x1x8x128xf32> to vector<8x128xf32>
    %c80 = arith.constant 80 : index
    %c0_46 = arith.constant 0 : index
    %32 = vector.load %arg9[%c80, %c0_46] : memref<200x128xf32, #tpu.memory_space<vmem>>, vector<8x128xf32>
    tpu.vector_store %arg9[%c80, %c0_46], %31 {strides = array<i32>} : memref<200x128xf32, #tpu.memory_space<vmem>>, vector<8x128xf32>,
    %c0_47 = arith.constant 0 : index
    %c0_48 = arith.constant 0 : index
    %c0_49 = arith.constant 0 : index
    %c17 = arith.constant 17 : index
    %33 = vector.load %arg3[%c0_47, %c0_48, %c0_49, %c17] : memref<1x1x8x256xf32, #tpu.memory_space<vmem>>, vector<1x1x8x128xf32>
    %34 = vector.shape_cast %33 : vector<1x1x8x128xf32> to vector<8x128xf32>
    %c88 = arith.constant 88 : index
    %c0_50 = arith.constant 0 : index
    %35 = vector.load %arg9[%c88, %c0_50] : memref<200x128xf32, #tpu.memory_space<vmem>>, vector<8x128xf32>
    tpu.vector_store %arg9[%c88, %c0_50], %34 {strides = array<i32>} : memref<200x128xf32, #tpu.memory_space<vmem>>, vector<8x128xf32>,
    %c0_51 = arith.constant 0 : index
    %c0_52 = arith.constant 0 : index
    %c0_53 = arith.constant 0 : index
    %c18 = arith.constant 18 : index
    %36 = vector.load %arg3[%c0_51, %c0_52, %c0_53, %c18] : memref<1x1x8x256xf32, #tpu.memory_space<vmem>>, vector<1x1x8x128xf32>
    %37 = vector.shape_cast %36 : vector<1x1x8x128xf32> to vector<8x128xf32>
    %c96 = arith.constant 96 : index
    %c0_54 = arith.constant 0 : index
    %38 = vector.load %arg9[%c96, %c0_54] : memref<200x128xf32, #tpu.memory_space<vmem>>, vector<8x128xf32>
    tpu.vector_store %arg9[%c96, %c0_54], %37 {strides = array<i32>} : memref<200x128xf32, #tpu.memory_space<vmem>>, vector<8x128xf32>,
    %c0_55 = arith.constant 0 : index
    %c0_56 = arith.constant 0 : index
    %c0_57 = arith.constant 0 : index
    %c19 = arith.constant 19 : index
    %39 = vector.load %arg3[%c0_55, %c0_56, %c0_57, %c19] : memref<1x1x8x256xf32, #tpu.memory_space<vmem>>, vector<1x1x8x128xf32>
    %40 = vector.shape_cast %39 : vector<1x1x8x128xf32> to vector<8x128xf32>
    %c104 = arith.constant 104 : index
    %c0_58 = arith.constant 0 : index
    %41 = vector.load %arg9[%c104, %c0_58] : memref<200x128xf32, #tpu.memory_space<vmem>>, vector<8x128xf32>
    tpu.vector_store %arg9[%c104, %c0_58], %40 {strides = array<i32>} : memref<200x128xf32, #tpu.memory_space<vmem>>, vector<8x128xf32>,
    %c0_59 = arith.constant 0 : index
    %c0_60 = arith.constant 0 : index
    %c0_61 = arith.constant 0 : index
    %c20 = arith.constant 20 : index
    %42 = vector.load %arg3[%c0_59, %c0_60, %c0_61, %c20] : memref<1x1x8x256xf32, #tpu.memory_space<vmem>>, vector<1x1x8x128xf32>
    %43 = vector.shape_cast %42 : vector<1x1x8x128xf32> to vector<8x128xf32>
    %c112 = arith.constant 112 : index
    %c0_62 = arith.constant 0 : index
    %44 = vector.load %arg9[%c112, %c0_62] : memref<200x128xf32, #tpu.memory_space<vmem>>, vector<8x128xf32>
    tpu.vector_store %arg9[%c112, %c0_62], %43 {strides = array<i32>} : memref<200x128xf32, #tpu.memory_space<vmem>>, vector<8x128xf32>,
    %c0_63 = arith.constant 0 : index
    %c0_64 = arith.constant 0 : index
    %c0_65 = arith.constant 0 : index
    %c24_66 = arith.constant 24 : index
    %45 = vector.load %arg3[%c0_63, %c0_64, %c0_65, %c24_66] : memref<1x1x8x256xf32, #tpu.memory_space<vmem>>, vector<1x1x8x128xf32>
    %46 = vector.shape_cast %45 : vector<1x1x8x128xf32> to vector<8x128xf32>
    %c120 = arith.constant 120 : index
    %c0_67 = arith.constant 0 : index
    %47 = vector.load %arg9[%c120, %c0_67] : memref<200x128xf32, #tpu.memory_space<vmem>>, vector<8x128xf32>
    tpu.vector_store %arg9[%c120, %c0_67], %46 {strides = array<i32>} : memref<200x128xf32, #tpu.memory_space<vmem>>, vector<8x128xf32>,
    %c0_68 = arith.constant 0 : index
    %c0_69 = arith.constant 0 : index
    %c0_70 = arith.constant 0 : index
    %c25 = arith.constant 25 : index
    %48 = vector.load %arg3[%c0_68, %c0_69, %c0_70, %c25] : memref<1x1x8x256xf32, #tpu.memory_space<vmem>>, vector<1x1x8x128xf32>
    %49 = vector.shape_cast %48 : vector<1x1x8x128xf32> to vector<8x128xf32>
    %c128 = arith.constant 128 : index
    %c0_71 = arith.constant 0 : index
    %50 = vector.load %arg9[%c128, %c0_71] : memref<200x128xf32, #tpu.memory_space<vmem>>, vector<8x128xf32>
    tpu.vector_store %arg9[%c128, %c0_71], %49 {strides = array<i32>} : memref<200x128xf32, #tpu.memory_space<vmem>>, vector<8x128xf32>,
    %c0_72 = arith.constant 0 : index
    %c0_73 = arith.constant 0 : index
    %c0_74 = arith.constant 0 : index
    %c26 = arith.constant 26 : index
    %51 = vector.load %arg3[%c0_72, %c0_73, %c0_74, %c26] : memref<1x1x8x256xf32, #tpu.memory_space<vmem>>, vector<1x1x8x128xf32>
    %52 = vector.shape_cast %51 : vector<1x1x8x128xf32> to vector<8x128xf32>
    %c136 = arith.constant 136 : index
    %c0_75 = arith.constant 0 : index
    %53 = vector.load %arg9[%c136, %c0_75] : memref<200x128xf32, #tpu.memory_space<vmem>>, vector<8x128xf32>
    tpu.vector_store %arg9[%c136, %c0_75], %52 {strides = array<i32>} : memref<200x128xf32, #tpu.memory_space<vmem>>, vector<8x128xf32>,
    %c0_76 = arith.constant 0 : index
    %c0_77 = arith.constant 0 : index
    %c0_78 = arith.constant 0 : index
    %c27 = arith.constant 27 : index
    %54 = vector.load %arg3[%c0_76, %c0_77, %c0_78, %c27] : memref<1x1x8x256xf32, #tpu.memory_space<vmem>>, vector<1x1x8x128xf32>
    %55 = vector.shape_cast %54 : vector<1x1x8x128xf32> to vector<8x128xf32>
    %c144 = arith.constant 144 : index
    %c0_79 = arith.constant 0 : index
    %56 = vector.load %arg9[%c144, %c0_79] : memref<200x128xf32, #tpu.memory_space<vmem>>, vector<8x128xf32>
    tpu.vector_store %arg9[%c144, %c0_79], %55 {strides = array<i32>} : memref<200x128xf32, #tpu.memory_space<vmem>>, vector<8x128xf32>,
    %c0_80 = arith.constant 0 : index
    %c0_81 = arith.constant 0 : index
    %c0_82 = arith.constant 0 : index
    %c28 = arith.constant 28 : index
    %57 = vector.load %arg3[%c0_80, %c0_81, %c0_82, %c28] : memref<1x1x8x256xf32, #tpu.memory_space<vmem>>, vector<1x1x8x128xf32>
    %58 = vector.shape_cast %57 : vector<1x1x8x128xf32> to vector<8x128xf32>
    %c152 = arith.constant 152 : index
    %c0_83 = arith.constant 0 : index
    %59 = vector.load %arg9[%c152, %c0_83] : memref<200x128xf32, #tpu.memory_space<vmem>>, vector<8x128xf32>
    tpu.vector_store %arg9[%c152, %c0_83], %58 {strides = array<i32>} : memref<200x128xf32, #tpu.memory_space<vmem>>, vector<8x128xf32>,
    %c0_84 = arith.constant 0 : index
    %c0_85 = arith.constant 0 : index
    %c0_86 = arith.constant 0 : index
    %c32_87 = arith.constant 32 : index
    %60 = vector.load %arg3[%c0_84, %c0_85, %c0_86, %c32_87] : memref<1x1x8x256xf32, #tpu.memory_space<vmem>>, vector<1x1x8x128xf32>
    %61 = vector.shape_cast %60 : vector<1x1x8x128xf32> to vector<8x128xf32>
    %c160 = arith.constant 160 : index
    %c0_88 = arith.constant 0 : index
    %62 = vector.load %arg9[%c160, %c0_88] : memref<200x128xf32, #tpu.memory_space<vmem>>, vector<8x128xf32>
    tpu.vector_store %arg9[%c160, %c0_88], %61 {strides = array<i32>} : memref<200x128xf32, #tpu.memory_space<vmem>>, vector<8x128xf32>,
    %c0_89 = arith.constant 0 : index
    %c0_90 = arith.constant 0 : index
    %c0_91 = arith.constant 0 : index
    %c33 = arith.constant 33 : index
    %63 = vector.load %arg3[%c0_89, %c0_90, %c0_91, %c33] : memref<1x1x8x256xf32, #tpu.memory_space<vmem>>, vector<1x1x8x128xf32>
    %64 = vector.shape_cast %63 : vector<1x1x8x128xf32> to vector<8x128xf32>
    %c168 = arith.constant 168 : index
    %c0_92 = arith.constant 0 : index
    %65 = vector.load %arg9[%c168, %c0_92] : memref<200x128xf32, #tpu.memory_space<vmem>>, vector<8x128xf32>
    tpu.vector_store %arg9[%c168, %c0_92], %64 {strides = array<i32>} : memref<200x128xf32, #tpu.memory_space<vmem>>, vector<8x128xf32>,
    %c0_93 = arith.constant 0 : index
    %c0_94 = arith.constant 0 : index
    %c0_95 = arith.constant 0 : index
    %c34 = arith.constant 34 : index
    %66 = vector.load %arg3[%c0_93, %c0_94, %c0_95, %c34] : memref<1x1x8x256xf32, #tpu.memory_space<vmem>>, vector<1x1x8x128xf32>
    %67 = vector.shape_cast %66 : vector<1x1x8x128xf32> to vector<8x128xf32>
    %c176 = arith.constant 176 : index
    %c0_96 = arith.constant 0 : index
    %68 = vector.load %arg9[%c176, %c0_96] : memref<200x128xf32, #tpu.memory_space<vmem>>, vector<8x128xf32>
    tpu.vector_store %arg9[%c176, %c0_96], %67 {strides = array<i32>} : memref<200x128xf32, #tpu.memory_space<vmem>>, vector<8x128xf32>,
    %c0_97 = arith.constant 0 : index
    %c0_98 = arith.constant 0 : index
    %c0_99 = arith.constant 0 : index
    %c35 = arith.constant 35 : index
    %69 = vector.load %arg3[%c0_97, %c0_98, %c0_99, %c35] : memref<1x1x8x256xf32, #tpu.memory_space<vmem>>, vector<1x1x8x128xf32>
    %70 = vector.shape_cast %69 : vector<1x1x8x128xf32> to vector<8x128xf32>
    %c184 = arith.constant 184 : index
    %c0_100 = arith.constant 0 : index
    %71 = vector.load %arg9[%c184, %c0_100] : memref<200x128xf32, #tpu.memory_space<vmem>>, vector<8x128xf32>
    tpu.vector_store %arg9[%c184, %c0_100], %70 {strides = array<i32>} : memref<200x128xf32, #tpu.memory_space<vmem>>, vector<8x128xf32>,
    %c0_101 = arith.constant 0 : index
    %c0_102 = arith.constant 0 : index
    %c0_103 = arith.constant 0 : index
    %c36 = arith.constant 36 : index
    %72 = vector.load %arg3[%c0_101, %c0_102, %c0_103, %c36] : memref<1x1x8x256xf32, #tpu.memory_space<vmem>>, vector<1x1x8x128xf32>
    %73 = vector.shape_cast %72 : vector<1x1x8x128xf32> to vector<8x128xf32>
    %c192 = arith.constant 192 : index
    %c0_104 = arith.constant 0 : index
    %74 = vector.load %arg9[%c192, %c0_104] : memref<200x128xf32, #tpu.memory_space<vmem>>, vector<8x128xf32>
    tpu.vector_store %arg9[%c192, %c0_104], %73 {strides = array<i32>} : memref<200x128xf32, #tpu.memory_space<vmem>>, vector<8x128xf32>,
    %c0_i32 = arith.constant 0 : i32
    %75 = arith.cmpi eq, %arg2, %c0_i32 : i32
    %76 = arith.extui %75 : i1 to i32
    %c0_i32_105 = arith.constant 0 : i32
    %77 = arith.cmpi ne, %76, %c0_i32_105 : i32
    scf.if %77 {
      %c0_116 = arith.constant 0 : index
      %c0_117 = arith.constant 0 : index
      %88 = vector.load %arg5[%c0_116, %c0_117] : memref<8x1xf32, #tpu.memory_space<vmem>>, vector<8x1xf32>
      %89 = vector.shape_cast %88 : vector<8x1xf32> to vector<8x1xf32>
      %90 = vector.broadcast %89 : vector<8x1xf32> to vector<8x128xf32>
      %c0_118 = arith.constant 0 : index
      %c0_119 = arith.constant 0 : index
      %91 = vector.load %arg10[%c0_118, %c0_119] : memref<8x128xf32, #tpu.memory_space<vmem>>, vector<8x128xf32>
      tpu.vector_store %arg10[%c0_118, %c0_119], %90 {strides = array<i32>} : memref<8x128xf32, #tpu.memory_space<vmem>>, vector<8x128xf32>,
    } else {
    }
    %c0_106 = arith.constant 0 : index
    %c0_107 = arith.constant 0 : index
    %78 = vector.load %arg10[%c0_106, %c0_107] : memref<8x128xf32, #tpu.memory_space<vmem>>, vector<8x128xf32>
    %c0_108 = arith.constant 0 : index
    %c0_109 = arith.constant 0 : index
    %c0_110 = arith.constant 0 : index
    %79 = vector.load %arg4[%c0_108, %c0_109, %c0_110] : memref<1x8x200xf32, #tpu.memory_space<vmem>>, vector<1x8x200xf32>
    %80 = vector.shape_cast %79 : vector<1x8x200xf32> to vector<8x200xf32>
    %c0_111 = arith.constant 0 : index
    %c0_112 = arith.constant 0 : index
    %81 = vector.load %arg9[%c0_111, %c0_112] : memref<200x128xf32, #tpu.memory_space<vmem>>, vector<200x128xf32>
    %cst = arith.constant dense<0.000000e+00> : vector<8x128xf32>
    %82 = tpu.matmul %80, %81, %cst {dimension_numbers = #tpu.dot_dimension_numbers<[1], [0], [0], [1], [0, 0, 1, 1], [], []>} : vector<8x200xf32>, vector<200x128xf32>, vector<8x128xf32> -> vector<8x128xf32>
    %83 = arith.addf %78, %82 : vector<8x128xf32>
    %c0_113 = arith.constant 0 : index
    %c0_114 = arith.constant 0 : index
    %84 = vector.load %arg10[%c0_113, %c0_114] : memref<8x128xf32, #tpu.memory_space<vmem>>, vector<8x128xf32>
    tpu.vector_store %arg10[%c0_113, %c0_114], %83 {strides = array<i32>} : memref<8x128xf32, #tpu.memory_space<vmem>>, vector<8x128xf32>,
    %c4_i32 = arith.constant 4 : i32
    %85 = arith.cmpi eq, %arg2, %c4_i32 : i32
    %86 = arith.extui %85 : i1 to i32
    %c0_i32_115 = arith.constant 0 : i32
    %87 = arith.cmpi ne, %86, %c0_i32_115 : i32
    scf.if %87 {
      %c0_116 = arith.constant 0 : index
      %c0_117 = arith.constant 0 : index
      %88 = vector.load %arg10[%c0_116, %c0_117] : memref<8x128xf32, #tpu.memory_space<vmem>>, vector<8x128xf32>
      %c0_118 = arith.constant 0 : index
      %c0_119 = arith.constant 0 : index
      %c0_120 = arith.constant 0 : index
      %c0_121 = arith.constant 0 : index
      %89 = vector.load %arg6[%c0_118, %c0_119, %c0_120, %c0_121] : memref<1x1x8x128xf32, #tpu.memory_space<vmem>>, vector<1x1x8x128xf32>
      %90 = vector.shape_cast %89 : vector<1x1x8x128xf32> to vector<8x128xf32>
      %91 = vector.shape_cast %88 : vector<8x128xf32> to vector<1x1x8x128xf32>
      tpu.vector_store %arg6[%c0_118, %c0_119, %c0_120, %c0_121], %91 {strides = array<i32>} : memref<1x1x8x128xf32, #tpu.memory_space<vmem>>, vector<1x1x8x128xf32>,
      %92 = tpu.iota {dimensions = array<i32: 1>} : vector<8x128xi32>
      %c8_i32 = arith.constant 8 : i32
      %c0_i32_122 = arith.constant 0 : i32
      %93 = arith.cmpi eq, %c8_i32, %c0_i32_122 : i32
      %c1_i32 = arith.constant 1 : i32
      %94 = arith.select %93, %c1_i32, %c8_i32 : i32
      %95 = vector.broadcast %94 : i32 to vector<8x128xi32>
      %96 = arith.remsi %92, %95 : vector<8x128xi32>
      %c0_i32_123 = arith.constant 0 : i32
      %97 = vector.broadcast %c0_i32_123 : i32 to vector<8x128xi32>
      %98 = arith.cmpi ne, %96, %97 : vector<8x128xi32>
      %c0_i32_124 = arith.constant 0 : i32
      %99 = vector.broadcast %c0_i32_124 : i32 to vector<8x128xi32>
      %100 = arith.cmpi slt, %96, %99 : vector<8x128xi32>
      %c0_i32_125 = arith.constant 0 : i32
      %101 = arith.cmpi slt, %94, %c0_i32_125 : i32
      %102 = vector.broadcast %101 : i1 to vector<8x128xi1>
      %103 = vector.broadcast %102 : vector<8x128xi1> to vector<8x128xi1>
      %104 = arith.xori %100, %103 : vector<8x128xi1>
      %105 = arith.andi %104, %98 : vector<8x128xi1>
      %106 = vector.broadcast %94 : i32 to vector<8x128xi32>
      %107 = arith.addi %96, %106 : vector<8x128xi32>
      %108 = arith.select %105, %107, %96 : vector<8x128xi1>, vector<8x128xi32>
      %c4_i32_126 = arith.constant 4 : i32
      %109 = vector.broadcast %c4_i32_126 : i32 to vector<8x128xi32>
      %110 = arith.cmpi slt, %108, %109 : vector<8x128xi32>
      %c32_i32 = arith.constant 32 : i32
      %111 = vector.broadcast %c32_i32 : i32 to vector<8x128xi32>
      %112 = arith.cmpi slt, %92, %111 : vector<8x128xi32>
      %113 = arith.andi %110, %112 : vector<8x128xi1>
      %cst_127 = arith.constant 0.000000e+00 : f32
      %114 = vector.broadcast %cst_127 : f32 to vector<8x128xf32>
      %115 = arith.select %113, %88, %114 : vector<8x128xi1>, vector<8x128xf32>
      %cst_128 = arith.constant dense<0.000000e+00> : vector<8xf32>
      %116 = vector.multi_reduction <add>, %115, %cst_128 [1] : vector<8x128xf32> to vector<8xf32>
      %117 = vector.shape_cast %116 : vector<8xf32> to vector<8x1xf32>
      %c0_129 = arith.constant 0 : index
      %c0_130 = arith.constant 0 : index
      %c0_131 = arith.constant 0 : index
      %c0_132 = arith.constant 0 : index
      %118 = vector.load %arg7[%c0_129, %c0_130, %c0_131, %c0_132] : memref<1x1x8x1xf32, #tpu.memory_space<vmem>>, vector<1x1x8x1xf32>
      %119 = vector.shape_cast %118 : vector<1x1x8x1xf32> to vector<8x1xf32>
      %120 = vector.shape_cast %117 : vector<8x1xf32> to vector<1x1x8x1xf32>
      tpu.vector_store %arg7[%c0_129, %c0_130, %c0_131, %c0_132], %120 {strides = array<i32>} : memref<1x1x8x1xf32, #tpu.memory_space<vmem>>, vector<1x1x8x1xf32>,
      %121 = arith.mulf %115, %115 : vector<8x128xf32>
      %cst_133 = arith.constant dense<0.000000e+00> : vector<8xf32>
      %122 = vector.multi_reduction <add>, %121, %cst_133 [1] : vector<8x128xf32> to vector<8xf32>
      %123 = vector.shape_cast %122 : vector<8xf32> to vector<8x1xf32>
      %c0_134 = arith.constant 0 : index
      %c0_135 = arith.constant 0 : index
      %c0_136 = arith.constant 0 : index
      %c0_137 = arith.constant 0 : index
      %124 = vector.load %arg8[%c0_134, %c0_135, %c0_136, %c0_137] : memref<1x1x8x1xf32, #tpu.memory_space<vmem>>, vector<1x1x8x1xf32>
      %125 = vector.shape_cast %124 : vector<1x1x8x1xf32> to vector<8x1xf32>
      %126 = vector.shape_cast %123 : vector<8x1xf32> to vector<1x1x8x1xf32>
      tpu.vector_store %arg8[%c0_134, %c0_135, %c0_136, %c0_137], %126 {strides = array<i32>} : memref<1x1x8x1xf32, #tpu.memory_space<vmem>>, vector<1x1x8x1xf32>,
    } else {
    }
    return
  }
  func.func @transform_0(%arg0: i32, %arg1: i32, %arg2: i32) -> (i32, i32, i32, i32) {
    %0 = arith.addi %arg1, %arg2 : i32
    %c0_i32 = arith.constant 0 : i32
    %c0_i32_0 = arith.constant 0 : i32
    %c0_i32_1 = arith.constant 0 : i32
    return %arg0, %0, %c0_i32, %c0_i32_0 : i32, i32, i32, i32
  }
  func.func @transform_1(%arg0: i32, %arg1: i32, %arg2: i32) -> (i32, i32, i32) {
    %c0_i32 = arith.constant 0 : i32
    %c0_i32_0 = arith.constant 0 : i32
    %c0_i32_1 = arith.constant 0 : i32
    return %arg2, %c0_i32, %c0_i32_0 : i32, i32, i32
  }
  func.func @transform_2(%arg0: i32, %arg1: i32, %arg2: i32) -> (i32, i32) {
    %c0_i32 = arith.constant 0 : i32
    %c0_i32_0 = arith.constant 0 : i32
    %c0_i32_1 = arith.constant 0 : i32
    return %c0_i32, %c0_i32_0 : i32, i32
  }
  func.func @transform_3(%arg0: i32, %arg1: i32, %arg2: i32) -> (i32, i32, i32, i32) {
    %c0_i32 = arith.constant 0 : i32
    %c0_i32_0 = arith.constant 0 : i32
    %c0_i32_1 = arith.constant 0 : i32
    return %arg0, %arg1, %c0_i32, %c0_i32_0 : i32, i32, i32, i32
  }
  func.func @transform_4(%arg0: i32, %arg1: i32, %arg2: i32) -> (i32, i32, i32, i32) {
    %c0_i32 = arith.constant 0 : i32
    %c0_i32_0 = arith.constant 0 : i32
    %c0_i32_1 = arith.constant 0 : i32
    return %arg0, %arg1, %c0_i32, %c0_i32_0 : i32, i32, i32, i32
  }
  func.func @transform_5(%arg0: i32, %arg1: i32, %arg2: i32) -> (i32, i32, i32, i32) {
    %c0_i32 = arith.constant 0 : i32
    %c0_i32_0 = arith.constant 0 : i32
    %c0_i32_1 = arith.constant 0 : i32
    return %arg0, %arg1, %c0_i32, %c0_i32_0 : i32, i32, i32, i32
  }
}

module attributes {stable_mosaic.version = 11 : i64} {
  func.func @_bn_act_kernel(%arg0: i32, %arg1: i32, %arg2: memref<1x8x128xf32, #tpu.memory_space<vmem>>, %arg3: memref<8x1xf32, #tpu.memory_space<vmem>>, %arg4: memref<8x1xf32, #tpu.memory_space<vmem>>, %arg5: memref<1x8x128xf32, #tpu.memory_space<vmem>>) attributes {dimension_semantics = [#tpu.dimension_semantics<parallel>, #tpu.dimension_semantics<parallel>], iteration_bounds = array<i64: 8, 1>, scalar_prefetch = 0 : i64, scratch_operands = 0 : i64, tpu.core_type = #tpu.core_type<tc>, window_params = [{transform_indices = @transform_0, window_bounds = array<i64: 1, 8, 128>}, {pipeline_mode = #tpu.pipeline_mode<synchronous>, transform_indices = @transform_1, window_bounds = array<i64: 8, 1>}, {pipeline_mode = #tpu.pipeline_mode<synchronous>, transform_indices = @transform_2, window_bounds = array<i64: 8, 1>}, {transform_indices = @transform_3, window_bounds = array<i64: 1, 8, 128>}]} {
    %c0 = arith.constant 0 : index
    %c0_0 = arith.constant 0 : index
    %c0_1 = arith.constant 0 : index
    %0 = vector.load %arg2[%c0, %c0_0, %c0_1] : memref<1x8x128xf32, #tpu.memory_space<vmem>>, vector<1x8x128xf32>
    %c0_2 = arith.constant 0 : index
    %c0_3 = arith.constant 0 : index
    %1 = vector.load %arg3[%c0_2, %c0_3] : memref<8x1xf32, #tpu.memory_space<vmem>>, vector<8x1xf32>
    %2 = vector.shape_cast %1 : vector<8x1xf32> to vector<1x8x1xf32>
    %3 = vector.broadcast %2 : vector<1x8x1xf32> to vector<1x8x128xf32>
    %4 = arith.mulf %0, %3 : vector<1x8x128xf32>
    %c0_4 = arith.constant 0 : index
    %c0_5 = arith.constant 0 : index
    %5 = vector.load %arg4[%c0_4, %c0_5] : memref<8x1xf32, #tpu.memory_space<vmem>>, vector<8x1xf32>
    %6 = vector.shape_cast %5 : vector<8x1xf32> to vector<1x8x1xf32>
    %7 = vector.broadcast %6 : vector<1x8x1xf32> to vector<1x8x128xf32>
    %8 = arith.addf %4, %7 : vector<1x8x128xf32>
    %cst = arith.constant 0.000000e+00 : f32
    %9 = vector.broadcast %cst : f32 to vector<1x8x128xf32>
    %10 = arith.cmpf ogt, %8, %9 : vector<1x8x128xf32>
    %cst_6 = arith.constant 0.000000e+00 : f32
    %11 = vector.broadcast %cst_6 : f32 to vector<1x8x128xf32>
    %12 = arith.minimumf %8, %11 : vector<1x8x128xf32>
    %13 = math.exp %12 : vector<1x8x128xf32>
    %cst_7 = arith.constant 1.000000e+00 : f32
    %14 = vector.broadcast %cst_7 : f32 to vector<1x8x128xf32>
    %15 = arith.subf %13, %14 : vector<1x8x128xf32>
    %16 = arith.select %10, %8, %15 : vector<1x8x128xi1>, vector<1x8x128xf32>
    %c0_8 = arith.constant 0 : index
    %c0_9 = arith.constant 0 : index
    %c0_10 = arith.constant 0 : index
    %17 = vector.load %arg5[%c0_8, %c0_9, %c0_10] : memref<1x8x128xf32, #tpu.memory_space<vmem>>, vector<1x8x128xf32>
    tpu.vector_store %arg5[%c0_8, %c0_9, %c0_10], %16 {strides = array<i32>} : memref<1x8x128xf32, #tpu.memory_space<vmem>>, vector<1x8x128xf32>,
    return
  }
  func.func @transform_0(%arg0: i32, %arg1: i32) -> (i32, i32, i32) {
    %c0_i32 = arith.constant 0 : i32
    %c0_i32_0 = arith.constant 0 : i32
    return %arg0, %c0_i32, %arg1 : i32, i32, i32
  }
  func.func @transform_1(%arg0: i32, %arg1: i32) -> (i32, i32) {
    %c0_i32 = arith.constant 0 : i32
    %c0_i32_0 = arith.constant 0 : i32
    %c0_i32_1 = arith.constant 0 : i32
    return %c0_i32, %c0_i32_0 : i32, i32
  }
  func.func @transform_2(%arg0: i32, %arg1: i32) -> (i32, i32) {
    %c0_i32 = arith.constant 0 : i32
    %c0_i32_0 = arith.constant 0 : i32
    %c0_i32_1 = arith.constant 0 : i32
    return %c0_i32, %c0_i32_0 : i32, i32
  }
  func.func @transform_3(%arg0: i32, %arg1: i32) -> (i32, i32, i32) {
    %c0_i32 = arith.constant 0 : i32
    %c0_i32_0 = arith.constant 0 : i32
    return %arg0, %c0_i32, %arg1 : i32, i32, i32
  }
}

module attributes {stable_mosaic.version = 11 : i64} {
  func.func @_add_act_kernel(%arg0: i32, %arg1: memref<8x1024xf32, #tpu.memory_space<vmem>>, %arg2: memref<8x1024xf32, #tpu.memory_space<vmem>>, %arg3: memref<8x1024xf32, #tpu.memory_space<vmem>>) attributes {dimension_semantics = [#tpu.dimension_semantics<parallel>], iteration_bounds = array<i64: 1>, scalar_prefetch = 0 : i64, scratch_operands = 0 : i64, tpu.core_type = #tpu.core_type<tc>, window_params = [{transform_indices = @transform_0, window_bounds = array<i64: 8, 1024>}, {transform_indices = @transform_1, window_bounds = array<i64: 8, 1024>}, {transform_indices = @transform_2, window_bounds = array<i64: 8, 1024>}]} {
    %c0 = arith.constant 0 : index
    %c0_0 = arith.constant 0 : index
    %0 = vector.load %arg1[%c0, %c0_0] : memref<8x1024xf32, #tpu.memory_space<vmem>>, vector<8x1024xf32>
    %c0_1 = arith.constant 0 : index
    %c0_2 = arith.constant 0 : index
    %1 = vector.load %arg2[%c0_1, %c0_2] : memref<8x1024xf32, #tpu.memory_space<vmem>>, vector<8x1024xf32>
    %2 = arith.addf %0, %1 : vector<8x1024xf32>
    %cst = arith.constant 0.000000e+00 : f32
    %3 = vector.broadcast %cst : f32 to vector<8x1024xf32>
    %4 = arith.cmpf ogt, %2, %3 : vector<8x1024xf32>
    %cst_3 = arith.constant 0.000000e+00 : f32
    %5 = vector.broadcast %cst_3 : f32 to vector<8x1024xf32>
    %6 = arith.minimumf %2, %5 : vector<8x1024xf32>
    %7 = math.exp %6 : vector<8x1024xf32>
    %cst_4 = arith.constant 1.000000e+00 : f32
    %8 = vector.broadcast %cst_4 : f32 to vector<8x1024xf32>
    %9 = arith.subf %7, %8 : vector<8x1024xf32>
    %10 = arith.select %4, %2, %9 : vector<8x1024xi1>, vector<8x1024xf32>
    %c0_5 = arith.constant 0 : index
    %c0_6 = arith.constant 0 : index
    %11 = vector.load %arg3[%c0_5, %c0_6] : memref<8x1024xf32, #tpu.memory_space<vmem>>, vector<8x1024xf32>
    tpu.vector_store %arg3[%c0_5, %c0_6], %10 {strides = array<i32>} : memref<8x1024xf32, #tpu.memory_space<vmem>>, vector<8x1024xf32>,
    return
  }
  func.func @transform_0(%arg0: i32) -> (i32, i32) {
    %c0_i32 = arith.constant 0 : i32
    %c0_i32_0 = arith.constant 0 : i32
    return %c0_i32, %arg0 : i32, i32
  }
  func.func @transform_1(%arg0: i32) -> (i32, i32) {
    %c0_i32 = arith.constant 0 : i32
    %c0_i32_0 = arith.constant 0 : i32
    return %c0_i32, %arg0 : i32, i32
  }
  func.func @transform_2(%arg0: i32) -> (i32, i32) {
    %c0_i32 = arith.constant 0 : i32
    %c0_i32_0 = arith.constant 0 : i32
    return %c0_i32, %arg0 : i32, i32
  }
}

</mosaic_0001>

<llo_original>
// kernel: down_transition_forward.8
$region0: #{down_transition_forward.8}
  #allocation0 [shape = 'u32[]', space=smem, size = 0x4, offset = 0x4, fixed_abs, tag = 'smem constant byte address 0x4 - core index']
  #allocation1 [shape = 'u32[144,128]{1,0:T(1,128)}', space=vmem, size = 0x12000, scoped, tag = 'internal scratch']
  %s0 = inlined_call_operand.vmem [shape: f32[1,8,1024], index: 0, kind: input, shape index: {}]
  %s1 = inlined_call_operand.vmem [shape: f32[8,1], index: 1, kind: input, shape index: {}]
  %s2 = inlined_call_operand.vmem [shape: f32[8,1], index: 2, kind: input, shape index: {}]
  %s3 = inlined_call_operand.vmem [shape: f32[1,8,1024], index: 3, kind: output, shape index: {}]
  %s4 = sld [smem:[#allocation0]]
  $region22: #{down_transition_forward.8} parent=0
    _
  %s6 = ssub.s32 1, %s4
  %s7 = scalar_select 0, %s6, %s4
  // Predicated region
  $region2: #{down_transition_forward.8} parent=0 // pred_check
    _
  $region3: #{down_transition_forward.8} parent=0 // pred_check_branch
    %9 = sbr.rel (0) target = $region5
  $region4: #{down_transition_forward.8} parent=0 // pred_region
    _
  $region5: #{down_transition_forward.8} parent=0 // pred_fallthru
    _
  // Predicated region
  $region6: #{down_transition_forward.8} parent=0 // pred_check
    _
  $region7: #{down_transition_forward.8} parent=0 // pred_check_branch
    %11 = sbr.rel (0) target = $region9
  $region8: #{down_transition_forward.8} parent=0 // pred_region
    _
  $region9: #{down_transition_forward.8} parent=0 // pred_fallthru
    _
  // Predicated region
  $region10: #{down_transition_forward.8} parent=0 // pred_check
    _
  $region11: #{down_transition_forward.8} parent=0 // pred_check_branch
    %13 = sbr.rel (0) target = $region13
  $region12: #{down_transition_forward.8} parent=0 // pred_region
    _
  $region13: #{down_transition_forward.8} parent=0 // pred_fallthru
    _
  %v14 = vld [vmem:[%s0] sm:$0xff]
  %v15 = vld [vmem:[%s0 + $0x8] sm:$0xff]
  %v16 = vld [vmem:[%s0 + $0x10] sm:$0xff]
  %v17 = vld [vmem:[%s0 + $0x18] sm:$0xff]
  %v18 = vld [vmem:[%s0 + $0x20] sm:$0xff]
  %v19 = vld [vmem:[%s0 + $0x28] sm:$0xff]
  %v20 = vld [vmem:[%s0 + $0x30] sm:$0xff]
  %v21 = vld [vmem:[%s0 + $0x38] sm:$0xff]
  %v22 = vld [vmem:[%s1] sm:$0xff]
  %24 = vset.pattern.permute.xlu0 0
  %25 = vperm.xlu0 %24, %v22
  %v26 = vpop.permute.xlu0 %25
  %v28 = vmul.f32 %v14, %v26
  %v29 = vmul.f32 %v15, %v26
  %v30 = vmul.f32 %v16, %v26
  %v31 = vmul.f32 %v17, %v26
  %v32 = vmul.f32 %v18, %v26
  %v33 = vmul.f32 %v19, %v26
  %v34 = vmul.f32 %v20, %v26
  %v35 = vmul.f32 %v21, %v26
  %v36 = vld [vmem:[%s2] sm:$0xff]
  %38 = vset.pattern.permute.xlu0 0
  %39 = vperm.xlu0 %38, %v36
  %v40 = vpop.permute.xlu0 %39
  %v42 = vadd.f32 %v28, %v40
  %v43 = vadd.f32 %v29, %v40
  %v44 = vadd.f32 %v30, %v40
  %v45 = vadd.f32 %v31, %v40
  %v46 = vadd.f32 %v32, %v40
  %v47 = vadd.f32 %v33, %v40
  %v48 = vadd.f32 %v34, %v40
  %v49 = vadd.f32 %v35, %v40
  %vm50 = vcmp.gt.f32.partialorder %v42, 0.0
  %vm51 = vcmp.gt.f32.partialorder %v43, 0.0
  %vm52 = vcmp.gt.f32.partialorder %v44, 0.0
  %vm53 = vcmp.gt.f32.partialorder %v45, 0.0
  %vm54 = vcmp.gt.f32.partialorder %v46, 0.0
  %vm55 = vcmp.gt.f32.partialorder %v47, 0.0
  %vm56 = vcmp.gt.f32.partialorder %v48, 0.0
  %vm57 = vcmp.gt.f32.partialorder %v49, 0.0
  %v58 = vmin.f32 %v42, 0.0
  %v59 = vmin.f32 %v43, 0.0
  %v60 = vmin.f32 %v44, 0.0
  %v61 = vmin.f32 %v45, 0.0
  %v62 = vmin.f32 %v46, 0.0
  %v63 = vmin.f32 %v47, 0.0
  %v64 = vmin.f32 %v48, 0.0
  %v65 = vmin.f32 %v49, 0.0
  %v66 = vmul.f32 %v58, 1.442695
  %v67 = vpow.pop %v66
  %v68 = vmul.f32 %v59, 1.442695
  %v69 = vpow.pop %v68
  %v70 = vmul.f32 %v60, 1.442695
  %v71 = vpow.pop %v70
  %v72 = vmul.f32 %v61, 1.442695
  %v73 = vpow.pop %v72
  %v74 = vmul.f32 %v62, 1.442695
  %v75 = vpow.pop %v74
  %v76 = vmul.f32 %v63, 1.442695
  %v77 = vpow.pop %v76
  %v78 = vmul.f32 %v64, 1.442695
  %v79 = vpow.pop %v78
  %v80 = vmul.f32 %v65, 1.442695
  %v81 = vpow.pop %v80
  %v82 = vsub.f32 %v67, 1.0
  %v83 = vsub.f32 %v69, 1.0
  %v84 = vsub.f32 %v71, 1.0
  %v85 = vsub.f32 %v73, 1.0
  %v86 = vsub.f32 %v75, 1.0
  %v87 = vsub.f32 %v77, 1.0
  %v88 = vsub.f32 %v79, 1.0
  %v89 = vsub.f32 %v81, 1.0
  %v90 = vsel %vm50, %v42, %v82
  %v91 = vsel %vm51, %v43, %v83
  %v92 = vsel %vm52, %v44, %v84
  %v93 = vsel %vm53, %v45, %v85
  %v94 = vsel %vm54, %v46, %v86
  %v95 = vsel %vm55, %v47, %v87
  %v96 = vsel %vm56, %v48, %v88
  %v97 = vsel %vm57, %v49, %v89
  %98 = vst [vmem:[%s3] sm:$0xff] %v90
  %99 = vst [vmem:[%s3 + $0x8] sm:$0xff] %v91
  %100 = vst [vmem:[%s3 + $0x10] sm:$0xff] %v92
  %101 = vst [vmem:[%s3 + $0x18] sm:$0xff] %v93
  %102 = vst [vmem:[%s3 + $0x20] sm:$0xff] %v94
  %103 = vst [vmem:[%s3 + $0x28] sm:$0xff] %v95
  %104 = vst [vmem:[%s3 + $0x30] sm:$0xff] %v96
  %105 = vst [vmem:[%s3 + $0x38] sm:$0xff] %v97
  // Predicated region
  $region14: #{down_transition_forward.8} parent=0 // pred_check
    _
  $region15: #{down_transition_forward.8} parent=0 // pred_check_branch
    %107 = sbr.rel (0) target = $region17
  $region16: #{down_transition_forward.8} parent=0 // pred_region
    _
  $region17: #{down_transition_forward.8} parent=0 // pred_fallthru
    _
  // Predicated region
  $region18: #{down_transition_forward.8} parent=0 // pred_check
    _
  $region19: #{down_transition_forward.8} parent=0 // pred_check_branch
    %109 = sbr.rel (0) target = $region21
  $region20: #{down_transition_forward.8} parent=0 // pred_region
    _
  $region21: #{down_transition_forward.8} parent=0 // pred_fallthru
    _

// kernel: down_transition_forward.7
$region0: #{down_transition_forward.7}
  #allocation0 [shape = 'u32[]', space=smem, size = 0x4, offset = 0x4, fixed_abs, tag = 'smem constant byte address 0x4 - core index']
  #allocation1 [shape = 'u32[144,128]{1,0:T(1,128)}', space=vmem, size = 0x12000, scoped, tag = 'internal scratch']
  %s0 = inlined_call_operand.vmem [shape: f32[32,1024], index: 0, kind: input, shape index: {}]
  %s1 = inlined_call_operand.vmem [shape: f32[8,32], index: 1, kind: input, shape index: {}]
  %s2 = inlined_call_operand.vmem [shape: f32[8,1], index: 2, kind: input, shape index: {}]
  %s3 = inlined_call_operand.vmem [shape: f32[8,1024], index: 3, kind: output, shape index: {0}]
  %s4 = inlined_call_operand.vmem [shape: f32[1,8,1], index: 4, kind: output, shape index: {1}]
  %s5 = inlined_call_operand.vmem [shape: f32[1,8,1], index: 5, kind: output, shape index: {2}]
  %6 = xla_tuple %s3, %s4, %s5
  %s7 = sld [smem:[#allocation0]]
  $region38: #{down_transition_forward.7} parent=0
    _
  %s9 = ssub.s32 1, %s7
  %s10 = scalar_select 0, %s9, %s7
  // Predicated region
  $region2: #{down_transition_forward.7} parent=0 // pred_check
    _
  $region3: #{down_transition_forward.7} parent=0 // pred_check_branch
    %12 = sbr.rel (0) target = $region5
  $region4: #{down_transition_forward.7} parent=0 // pred_region
    _
  $region5: #{down_transition_forward.7} parent=0 // pred_fallthru
    _
  // Predicated region
  $region6: #{down_transition_forward.7} parent=0 // pred_check
    _
  $region7: #{down_transition_forward.7} parent=0 // pred_check_branch
    %14 = sbr.rel (0) target = $region9
  $region8: #{down_transition_forward.7} parent=0 // pred_region
    _
  $region9: #{down_transition_forward.7} parent=0 // pred_fallthru
    _
  // Predicated region
  $region10: #{down_transition_forward.7} parent=0 // pred_check
    _
  $region11: #{down_transition_forward.7} parent=0 // pred_check_branch
    %16 = sbr.rel (0) target = $region13
  $region12: #{down_transition_forward.7} parent=0 // pred_region
    _
  $region13: #{down_transition_forward.7} parent=0 // pred_fallthru
    _
  %v17 = vld [vmem:[%s1] sm:$0xff]
  %v18 = vld [vmem:[%s0] sm:$0xff]
  %v19 = vld [vmem:[%s0 + $0x8] sm:$0xff]
  %v20 = vld [vmem:[%s0 + $0x10] sm:$0xff]
  %v21 = vld [vmem:[%s0 + $0x18] sm:$0xff]
  %v22 = vld [vmem:[%s0 + $0x20] sm:$0xff]
  %v23 = vld [vmem:[%s0 + $0x28] sm:$0xff]
  %v24 = vld [vmem:[%s0 + $0x30] sm:$0xff]
  %v25 = vld [vmem:[%s0 + $0x38] sm:$0xff]
  %v26 = vld [vmem:[%s0 + $0x40] sm:$0xff]
  %v27 = vld [vmem:[%s0 + $0x48] sm:$0xff]
  %v28 = vld [vmem:[%s0 + $0x50] sm:$0xff]
  %v29 = vld [vmem:[%s0 + $0x58] sm:$0xff]
  %v30 = vld [vmem:[%s0 + $0x60] sm:$0xff]
  %v31 = vld [vmem:[%s0 + $0x68] sm:$0xff]
  %v32 = vld [vmem:[%s0 + $0x70] sm:$0xff]
  %v33 = vld [vmem:[%s0 + $0x78] sm:$0xff]
  %v34 = vld [vmem:[%s0 + $0x80] sm:$0xff]
  %v35 = vld [vmem:[%s0 + $0x88] sm:$0xff]
  %v36 = vld [vmem:[%s0 + $0x90] sm:$0xff]
  %v37 = vld [vmem:[%s0 + $0x98] sm:$0xff]
  %v38 = vld [vmem:[%s0 + $0xa0] sm:$0xff]
  %v39 = vld [vmem:[%s0 + $0xa8] sm:$0xff]
  %v40 = vld [vmem:[%s0 + $0xb0] sm:$0xff]
  %v41 = vld [vmem:[%s0 + $0xb8] sm:$0xff]
  %v42 = vld [vmem:[%s0 + $0xc0] sm:$0xff]
  %v43 = vld [vmem:[%s0 + $0xc8] sm:$0xff]
  %v44 = vld [vmem:[%s0 + $0xd0] sm:$0xff]
  %v45 = vld [vmem:[%s0 + $0xd8] sm:$0xff]
  %v46 = vld [vmem:[%s0 + $0xe0] sm:$0xff]
  %v47 = vld [vmem:[%s0 + $0xe8] sm:$0xff]
  %v48 = vld [vmem:[%s0 + $0xf0] sm:$0xff]
  %v49 = vld [vmem:[%s0 + $0xf8] sm:$0xff]
  %v50 = vld [vmem:[%s2] sm:$0xff]
  %52 = vset.pattern.permute.xlu0 0
  %53 = vperm.xlu0 %52, %v50
  %v54 = vpop.permute.xlu0 %53
  %vm56 = vcmask 261120
  %v58 = vsel %vm56, %v17, 0
  %60 = vmatprep.subr.mxu0 0.0
  %61 = vmatpush1.msra.mxu0 0.0
  %62 = vmatprep.subr.mxu0 0.0
  %63 = vmatpush1.msra.mxu0 0.0
  %64 = vmatprep.subr.mxu0 0.0
  %65 = vmatpush1.msra.mxu0 0.0
  %66 = vmatprep.subr.mxu0 0.0
  %67 = vmatpush1.msra.mxu0 0.0
  %68 = vmatprep.subr.mxu0 0.0
  %69 = vmatpush1.msra.mxu0 0.0
  %70 = vmatprep.subr.mxu0 0.0
  %71 = vmatpush1.msra.mxu0 0.0
  %72 = vmatprep.subr.mxu0 0.0
  %73 = vmatpush1.msra.mxu0 0.0
  %74 = vmatprep.subr.mxu0 0.0
  %75 = vmatpush1.msra.mxu0 0.0
  %76 = vmatprep.subr.mxu0 0.0
  %77 = vmatpush1.msra.mxu0 0.0
  %78 = vmatprep.subr.mxu0 0.0
  %79 = vmatpush1.msra.mxu0 0.0
  %80 = vmatprep.subr.mxu0 0.0
  %81 = vmatpush1.msra.mxu0 0.0
  %82 = vmatprep.subr.mxu0 0.0
  %83 = vmatpush1.msra.mxu0 0.0
  %84 = vmatprep.subr.mxu0 %v43
  %85 = vmatpush1.msra.mxu0 %v42
  %86 = vmatprep.subr.mxu0 %v35
  %87 = vmatpush1.msra.mxu0 %v34
  %88 = vmatprep.subr.mxu0 %v27
  %89 = vmatpush1.msra.mxu0 %v26
  %90 = vmatprep.subr.mxu0 %v19
  %91 = vmatpush1.msra.mxu0 %v18
  %92 = vmatprep.subr.mxu0 0.0
  %93 = vmatpush2.msra.mxu0 0.0
  %94 = vmatprep.subr.mxu0 0.0
  %95 = vmatpush2.msra.mxu0 0.0
  %96 = vmatprep.subr.mxu0 0.0
  %97 = vmatpush2.msra.mxu0 0.0
  %98 = vmatprep.subr.mxu0 0.0
  %99 = vmatpush2.msra.mxu0 0.0
  %100 = vmatprep.subr.mxu0 0.0
  %101 = vmatpush2.msra.mxu0 0.0
  %102 = vmatprep.subr.mxu0 0.0
  %103 = vmatpush2.msra.mxu0 0.0
  %104 = vmatprep.subr.mxu0 0.0
  %105 = vmatpush2.msra.mxu0 0.0
  %106 = vmatprep.subr.mxu0 0.0
  %107 = vmatpush2.msra.mxu0 0.0
  %108 = vmatprep.subr.mxu0 0.0
  %109 = vmatpush2.msra.mxu0 0.0
  %110 = vmatprep.subr.mxu0 0.0
  %111 = vmatpush2.msra.mxu0 0.0
  %112 = vmatprep.subr.mxu0 0.0
  %113 = vmatpush2.msra.mxu0 0.0
  %114 = vmatprep.subr.mxu0 0.0
  %115 = vmatpush2.msra.mxu0 0.0
  %116 = vmatprep.subr.mxu0 0.0
  %117 = vmatpush2.msra.mxu0 0.0
  %118 = vmatprep.subr.mxu0 0.0
  %119 = vmatpush2.msra.mxu0 0.0
  %120 = vmatprep.subr.mxu0 0.0
  %121 = vmatpush2.msra.mxu0 0.0
  %122 = vmatprep.subr.mxu0 0.0
  %123 = vmatpush2.msra.mxu0 0.0
  %124 = vmatprep.mubr.f32.mxu0 0.0
  %125 = vmatmul.mubr.f32.gmra.mxu0 %v58
  %v126 = vpop.f32.mrf.mxu0
  %v127 = vadd.f32 %v54, %v126
  %v128 = vpop.f32.mrf.mxu0
  %v129 = vadd.f32 %v54, %v128
  %130 = vdwg.mxu0
  %131 = vmatprep.subr.mxu0 0.0
  %132 = vmatpush1.msra.mxu0 0.0
  %133 = vmatprep.subr.mxu0 0.0
  %134 = vmatpush1.msra.mxu0 0.0
  %135 = vmatprep.subr.mxu0 0.0
  %136 = vmatpush1.msra.mxu0 0.0
  %137 = vmatprep.subr.mxu0 0.0
  %138 = vmatpush1.msra.mxu0 0.0
  %139 = vmatprep.subr.mxu0 0.0
  %140 = vmatpush1.msra.mxu0 0.0
  %141 = vmatprep.subr.mxu0 0.0
  %142 = vmatpush1.msra.mxu0 0.0
  %143 = vmatprep.subr.mxu0 0.0
  %144 = vmatpush1.msra.mxu0 0.0
  %145 = vmatprep.subr.mxu0 0.0
  %146 = vmatpush1.msra.mxu0 0.0
  %147 = vmatprep.subr.mxu0 0.0
  %148 = vmatpush1.msra.mxu0 0.0
  %149 = vmatprep.subr.mxu0 0.0
  %150 = vmatpush1.msra.mxu0 0.0
  %151 = vmatprep.subr.mxu0 0.0
  %152 = vmatpush1.msra.mxu0 0.0
  %153 = vmatprep.subr.mxu0 0.0
  %154 = vmatpush1.msra.mxu0 0.0
  %155 = vmatprep.subr.mxu0 %v45
  %156 = vmatpush1.msra.mxu0 %v44
  %157 = vmatprep.subr.mxu0 %v37
  %158 = vmatpush1.msra.mxu0 %v36
  %159 = vmatprep.subr.mxu0 %v29
  %160 = vmatpush1.msra.mxu0 %v28
  %161 = vmatprep.subr.mxu0 %v21
  %162 = vmatpush1.msra.mxu0 %v20
  %163 = vmatprep.subr.mxu0 0.0
  %164 = vmatpush2.msra.mxu0 0.0
  %165 = vmatprep.subr.mxu0 0.0
  %166 = vmatpush2.msra.mxu0 0.0
  %167 = vmatprep.subr.mxu0 0.0
  %168 = vmatpush2.msra.mxu0 0.0
  %169 = vmatprep.subr.mxu0 0.0
  %170 = vmatpush2.msra.mxu0 0.0
  %171 = vmatprep.subr.mxu0 0.0
  %172 = vmatpush2.msra.mxu0 0.0
  %173 = vmatprep.subr.mxu0 0.0
  %174 = vmatpush2.msra.mxu0 0.0
  %175 = vmatprep.subr.mxu0 0.0
  %176 = vmatpush2.msra.mxu0 0.0
  %177 = vmatprep.subr.mxu0 0.0
  %178 = vmatpush2.msra.mxu0 0.0
  %179 = vmatprep.subr.mxu0 0.0
  %180 = vmatpush2.msra.mxu0 0.0
  %181 = vmatprep.subr.mxu0 0.0
  %182 = vmatpush2.msra.mxu0 0.0
  %183 = vmatprep.subr.mxu0 0.0
  %184 = vmatpush2.msra.mxu0 0.0
  %185 = vmatprep.subr.mxu0 0.0
  %186 = vmatpush2.msra.mxu0 0.0
  %187 = vmatprep.subr.mxu0 0.0
  %188 = vmatpush2.msra.mxu0 0.0
  %189 = vmatprep.subr.mxu0 0.0
  %190 = vmatpush2.msra.mxu0 0.0
  %191 = vmatprep.subr.mxu0 0.0
  %192 = vmatpush2.msra.mxu0 0.0
  %193 = vmatprep.subr.mxu0 0.0
  %194 = vmatpush2.msra.mxu0 0.0
  %195 = vmatprep.mubr.f32.mxu0 0.0
  %196 = vmatmul.mubr.f32.gmra.mxu0 %v58
  %v197 = vpop.f32.mrf.mxu0
  %v198 = vadd.f32 %v54, %v197
  %v199 = vpop.f32.mrf.mxu0
  %v200 = vadd.f32 %v54, %v199
  %201 = vdwg.mxu0
  %202 = vmatprep.subr.mxu0 0.0
  %203 = vmatpush1.msra.mxu0 0.0
  %204 = vmatprep.subr.mxu0 0.0
  %205 = vmatpush1.msra.mxu0 0.0
  %206 = vmatprep.subr.mxu0 0.0
  %207 = vmatpush1.msra.mxu0 0.0
  %208 = vmatprep.subr.mxu0 0.0
  %209 = vmatpush1.msra.mxu0 0.0
  %210 = vmatprep.subr.mxu0 0.0
  %211 = vmatpush1.msra.mxu0 0.0
  %212 = vmatprep.subr.mxu0 0.0
  %213 = vmatpush1.msra.mxu0 0.0
  %214 = vmatprep.subr.mxu0 0.0
  %215 = vmatpush1.msra.mxu0 0.0
  %216 = vmatprep.subr.mxu0 0.0
  %217 = vmatpush1.msra.mxu0 0.0
  %218 = vmatprep.subr.mxu0 0.0
  %219 = vmatpush1.msra.mxu0 0.0
  %220 = vmatprep.subr.mxu0 0.0
  %221 = vmatpush1.msra.mxu0 0.0
  %222 = vmatprep.subr.mxu0 0.0
  %223 = vmatpush1.msra.mxu0 0.0
  %224 = vmatprep.subr.mxu0 0.0
  %225 = vmatpush1.msra.mxu0 0.0
  %226 = vmatprep.subr.mxu0 %v47
  %227 = vmatpush1.msra.mxu0 %v46
  %228 = vmatprep.subr.mxu0 %v39
  %229 = vmatpush1.msra.mxu0 %v38
  %230 = vmatprep.subr.mxu0 %v31
  %231 = vmatpush1.msra.mxu0 %v30
  %232 = vmatprep.subr.mxu0 %v23
  %233 = vmatpush1.msra.mxu0 %v22
  %234 = vmatprep.subr.mxu0 0.0
  %235 = vmatpush2.msra.mxu0 0.0
  %236 = vmatprep.subr.mxu0 0.0
  %237 = vmatpush2.msra.mxu0 0.0
  %238 = vmatprep.subr.mxu0 0.0
  %239 = vmatpush2.msra.mxu0 0.0
  %240 = vmatprep.subr.mxu0 0.0
  %241 = vmatpush2.msra.mxu0 0.0
  %242 = vmatprep.subr.mxu0 0.0
  %243 = vmatpush2.msra.mxu0 0.0
  %244 = vmatprep.subr.mxu0 0.0
  %245 = vmatpush2.msra.mxu0 0.0
  %246 = vmatprep.subr.mxu0 0.0
  %247 = vmatpush2.msra.mxu0 0.0
  %248 = vmatprep.subr.mxu0 0.0
  %249 = vmatpush2.msra.mxu0 0.0
  %250 = vmatprep.subr.mxu0 0.0
  %251 = vmatpush2.msra.mxu0 0.0
  %252 = vmatprep.subr.mxu0 0.0
  %253 = vmatpush2.msra.mxu0 0.0
  %254 = vmatprep.subr.mxu0 0.0
  %255 = vmatpush2.msra.mxu0 0.0
  %256 = vmatprep.subr.mxu0 0.0
  %257 = vmatpush2.msra.mxu0 0.0
  %258 = vmatprep.subr.mxu0 0.0
  %259 = vmatpush2.msra.mxu0 0.0
  %260 = vmatprep.subr.mxu0 0.0
  %261 = vmatpush2.msra.mxu0 0.0
  %262 = vmatprep.subr.mxu0 0.0
  %263 = vmatpush2.msra.mxu0 0.0
  %264 = vmatprep.subr.mxu0 0.0
  %265 = vmatpush2.msra.mxu0 0.0
  %266 = vmatprep.mubr.f32.mxu0 0.0
  %267 = vmatmul.mubr.f32.gmra.mxu0 %v58
  %v268 = vpop.f32.mrf.mxu0
  %v269 = vadd.f32 %v54, %v268
  %v270 = vpop.f32.mrf.mxu0
  %v271 = vadd.f32 %v54, %v270
  %272 = vdwg.mxu0
  %273 = vmatprep.subr.mxu0 0.0
  %274 = vmatpush1.msra.mxu0 0.0
  %275 = vmatprep.subr.mxu0 0.0
  %276 = vmatpush1.msra.mxu0 0.0
  %277 = vmatprep.subr.mxu0 0.0
  %278 = vmatpush1.msra.mxu0 0.0
  %279 = vmatprep.subr.mxu0 0.0
  %280 = vmatpush1.msra.mxu0 0.0
  %281 = vmatprep.subr.mxu0 0.0
  %282 = vmatpush1.msra.mxu0 0.0
  %283 = vmatprep.subr.mxu0 0.0
  %284 = vmatpush1.msra.mxu0 0.0
  %285 = vmatprep.subr.mxu0 0.0
  %286 = vmatpush1.msra.mxu0 0.0
  %287 = vmatprep.subr.mxu0 0.0
  %288 = vmatpush1.msra.mxu0 0.0
  %289 = vmatprep.subr.mxu0 0.0
  %290 = vmatpush1.msra.mxu0 0.0
  %291 = vmatprep.subr.mxu0 0.0
  %292 = vmatpush1.msra.mxu0 0.0
  %293 = vmatprep.subr.mxu0 0.0
  %294 = vmatpush1.msra.mxu0 0.0
  %295 = vmatprep.subr.mxu0 0.0
  %296 = vmatpush1.msra.mxu0 0.0
  %297 = vmatprep.subr.mxu0 %v49
  %298 = vmatpush1.msra.mxu0 %v48
  %299 = vmatprep.subr.mxu0 %v41
  %300 = vmatpush1.msra.mxu0 %v40
  %301 = vmatprep.subr.mxu0 %v33
  %302 = vmatpush1.msra.mxu0 %v32
  %303 = vmatprep.subr.mxu0 %v25
  %304 = vmatpush1.msra.mxu0 %v24
  %305 = vmatprep.subr.mxu0 0.0
  %306 = vmatpush2.msra.mxu0 0.0
  %307 = vmatprep.subr.mxu0 0.0
  %308 = vmatpush2.msra.mxu0 0.0
  %309 = vmatprep.subr.mxu0 0.0
  %310 = vmatpush2.msra.mxu0 0.0
  %311 = vmatprep.subr.mxu0 0.0
  %312 = vmatpush2.msra.mxu0 0.0
  %313 = vmatprep.subr.mxu0 0.0
  %314 = vmatpush2.msra.mxu0 0.0
  %315 = vmatprep.subr.mxu0 0.0
  %316 = vmatpush2.msra.mxu0 0.0
  %317 = vmatprep.subr.mxu0 0.0
  %318 = vmatpush2.msra.mxu0 0.0
  %319 = vmatprep.subr.mxu0 0.0
  %320 = vmatpush2.msra.mxu0 0.0
  %321 = vmatprep.subr.mxu0 0.0
  %322 = vmatpush2.msra.mxu0 0.0
  %323 = vmatprep.subr.mxu0 0.0
  %324 = vmatpush2.msra.mxu0 0.0
  %325 = vmatprep.subr.mxu0 0.0
  %326 = vmatpush2.msra.mxu0 0.0
  %327 = vmatprep.subr.mxu0 0.0
  %328 = vmatpush2.msra.mxu0 0.0
  %329 = vmatprep.subr.mxu0 0.0
  %330 = vmatpush2.msra.mxu0 0.0
  %331 = vmatprep.subr.mxu0 0.0
  %332 = vmatpush2.msra.mxu0 0.0
  %333 = vmatprep.subr.mxu0 0.0
  %334 = vmatpush2.msra.mxu0 0.0
  %335 = vmatprep.subr.mxu0 0.0
  %336 = vmatpush2.msra.mxu0 0.0
  %337 = vmatprep.mubr.f32.mxu0 0.0
  %338 = vmatmul.mubr.f32.gmra.mxu0 %v58
  %v339 = vpop.f32.mrf.mxu0
  %v340 = vadd.f32 %v54, %v339
  %v341 = vpop.f32.mrf.mxu0
  %v342 = vadd.f32 %v54, %v341
  %343 = vdwg.mxu0
  %344 = vst [vmem:[%s3] sm:$0xff] %v127
  %345 = vst [vmem:[%s3 + $0x8] sm:$0xff] %v129
  %346 = vst [vmem:[%s3 + $0x10] sm:$0xff] %v198
  %347 = vst [vmem:[%s3 + $0x18] sm:$0xff] %v200
  %348 = vst [vmem:[%s3 + $0x20] sm:$0xff] %v269
  %349 = vst [vmem:[%s3 + $0x28] sm:$0xff] %v271
  %350 = vst [vmem:[%s3 + $0x30] sm:$0xff] %v340
  %351 = vst [vmem:[%s3 + $0x38] sm:$0xff] %v342
  %v352 = vadd.f32 %v127, %v129
  %v353 = vadd.f32 %v352, %v198
  %v354 = vadd.f32 %v353, %v200
  %v355 = vadd.f32 %v354, %v269
  %v356 = vadd.f32 %v355, %v271
  %v357 = vadd.f32 %v356, %v340
  %v358 = vadd.f32 %v357, %v342
  %359 = vadd.xlane.f32.xlu0 %v358
  %v360 = vpop.xlane.xlu0 %359
  %vm361 = vcmask 7168
  %362 = vst.msk [vmem:[%s4] sm:$0xff] %vm361, %v360
  %v363 = vmul.f32 %v127, %v127
  %v364 = vmul.f32 %v129, %v129
  %v365 = vmul.f32 %v198, %v198
  %v366 = vmul.f32 %v200, %v200
  %v367 = vmul.f32 %v269, %v269
  %v368 = vmul.f32 %v271, %v271
  %v369 = vmul.f32 %v340, %v340
  %v370 = vmul.f32 %v342, %v342
  %v371 = vadd.f32 %v363, %v364
  %v372 = vadd.f32 %v371, %v365
  %v373 = vadd.f32 %v372, %v366
  %v374 = vadd.f32 %v373, %v367
  %v375 = vadd.f32 %v374, %v368
  %v376 = vadd.f32 %v375, %v369
  %v377 = vadd.f32 %v376, %v370
  %378 = vadd.xlane.f32.xlu0 %v377
  %v379 = vpop.xlane.xlu0 %378
  %380 = vst.msk [vmem:[%s5] sm:$0xff] %vm361, %v379
  // Predicated region
  $region14: #{down_transition_forward.7} parent=0 // pred_check
    _
  $region15: #{down_transition_forward.7} parent=0 // pred_check_branch
    %382 = sbr.rel (0) target = $region17
  $region16: #{down_transition_forward.7} parent=0 // pred_region
    _
  $region17: #{down_transition_forward.7} parent=0 // pred_fallthru
    _
  // Predicated region
  $region18: #{down_transition_forward.7} parent=0 // pred_check
    _
  $region19: #{down_transition_forward.7} parent=0 // pred_check_branch
    %384 = sbr.rel (0) target = $region21
  $region20: #{down_transition_forward.7} parent=0 // pred_region
    _
  $region21: #{down_transition_forward.7} parent=0 // pred_fallthru
    _
  // Predicated region
  $region22: #{down_transition_forward.7} parent=0 // pred_check
    _
  $region23: #{down_transition_forward.7} parent=0 // pred_check_branch
    %386 = sbr.rel (0) target = $region25
  $region24: #{down_transition_forward.7} parent=0 // pred_region
    _
  $region25: #{down_transition_forward.7} parent=0 // pred_fallthru
    _
  // Predicated region
  $region26: #{down_transition_forward.7} parent=0 // pred_check
    _
  $region27: #{down_transition_forward.7} parent=0 // pred_check_branch
    %388 = sbr.rel (0) target = $region29
  $region28: #{down_transition_forward.7} parent=0 // pred_region
    _
  $region29: #{down_transition_forward.7} parent=0 // pred_fallthru
    _
  // Predicated region
  $region30: #{down_transition_forward.7} parent=0 // pred_check
    _
  $region31: #{down_transition_forward.7} parent=0 // pred_check_branch
    %390 = sbr.rel (0) target = $region33
  $region32: #{down_transition_forward.7} parent=0 // pred_region
    _
  $region33: #{down_transition_forward.7} parent=0 // pred_fallthru
    _
  // Predicated region
  $region34: #{down_transition_forward.7} parent=0 // pred_check
    _
  $region35: #{down_transition_forward.7} parent=0 // pred_check_branch
    %392 = sbr.rel (0) target = $region37
  $region36: #{down_transition_forward.7} parent=0 // pred_region
    _
  $region37: #{down_transition_forward.7} parent=0 // pred_fallthru
    _

// kernel: down_transition_forward.10
$region0: #{down_transition_forward.10}
  #allocation0 [shape = 'u32[]', space=smem, size = 0x4, offset = 0x4, fixed_abs, tag = 'smem constant byte address 0x4 - core index']
  #allocation1 [shape = 'u32[144,128]{1,0:T(1,128)}', space=vmem, size = 0x12000, scoped, tag = 'internal scratch']
  %s0 = inlined_call_operand.vmem [shape: f32[8,8,128], index: 0, kind: input, shape index: {}]
  %s1 = inlined_call_operand.vmem [shape: f32[8,1], index: 1, kind: input, shape index: {}]
  %s2 = inlined_call_operand.vmem [shape: f32[8,1], index: 2, kind: input, shape index: {}]
  %s3 = inlined_call_operand.vmem [shape: f32[8,8,128], index: 3, kind: output, shape index: {}]
  %s4 = sld [smem:[#allocation0]]
  $region45: #{down_transition_forward.10} parent=0
    _
  %s6 = ssub.s32 1, %s4
  %s7 = scalar_select 0, %s6, %s4
  loop: start=0, step=1, limit=10
  $region2: #{down_transition_forward.10} parent=0 // loop_pre_header
    _
  $region3: #{down_transition_forward.10} parent=0 // loop_header
    %s9 = sphi 0, %s13
    %p10 = scmp.ge.s32.totalorder %s9, 10
    %s16 = sphi 0, %s28
    %s17 = sphi 0, %s24
    %s18 = sphi 0, %s16
    %s19 = sphi 0, %s17
    %s20 = sphi 0, %s18
    %s21 = sphi 0, %s19
    %s33 = sphi 0, %s35
    %s36 = sphi 0, %s33
    %s37 = sphi 0, %s36
    %s53 = sphi 0, %s37
    %s57 = sphi 0, %s57
    %s59 = sphi 0, %s57
    %s60 = sphi 0, %s59
    %s74 = sphi 0, %s60
    %s78 = sphi 0, %s78
    %s80 = sphi 0, %s78
    %s81 = sphi 0, %s80
    %s95 = sphi 0, %s81
    %s103 = sphi 0, %s105
    %s106 = sphi 0, %s103
    %s107 = sphi 0, %s106
    %s123 = sphi 0, %s107
  $region4: #{down_transition_forward.10} parent=0 // loop_header_branch
    %12 = sbr.rel (%p10) target = $region8
  $region5: #{down_transition_forward.10} parent=0 // loop_body
    %s14 = ssub.s32 %s9, 1
    %s15 = ssub.s32 %s9, 2
    %s22 = sadd.s32 1, %s17
    %p23 = scmp.ge.s32.totalorder %s22, 1
    %s24 = scalar_select %p23, 0, %s22
    %s25 = sadd.s32 1, %s16
    %s26 = scalar_select %p23, %s25, %s16
    %p27 = scmp.ge.s32.totalorder %s26, 8
    %s28 = scalar_select %p27, 0, %s26
    %s29 = ssub.s32 %s16, %s28
    %s30 = ssub.s32 %s17, %s24
    %s31 = sor.u32 %s29, %s30
    %p32 = scmp.eq.s32.totalorder %s31, 0
    %s34 = sadd.s32 %s33, 1
    %s35 = scalar_select %p32, %s33, %s34
    %p38 = pneg %p32
    %p39 = scmp.eq.s32.totalorder %s9, 7
    %p40 = por %p38, %p39
    %p41 = scmp.ne.s32.totalorder %s33, %s36
    %p42 = scmp.eq.s32.totalorder %s9, 0
    %p43 = por %p41, %p42
    %p44 = scmp.ne.s32.totalorder %s33, %s36
    %p45 = scmp.eq.s32.totalorder %s14, 7
    %p46 = por %p44, %p45
    %p47 = scmp.ne.s32.totalorder %s36, %s37
    %p48 = scmp.eq.s32.totalorder %s14, 0
    %p49 = por %p47, %p48
    %p50 = scmp.ne.s32.totalorder %s36, %s37
    %p51 = scmp.eq.s32.totalorder %s15, 7
    %p52 = por %p50, %p51
    %p54 = scmp.ne.s32.totalorder %s37, %s53
    %p55 = scmp.eq.s32.totalorder %s15, 0
    %p56 = por %p54, %p55
    %s58 = sadd.s32 %s57, 1
    %p61 = scmp.eq.s32.totalorder %s9, 7
    %p62 = scmp.ne.s32.totalorder %s57, %s59
    %p63 = scmp.eq.s32.totalorder %s9, 0
    %p64 = por %p62, %p63
    %p65 = scmp.ne.s32.totalorder %s57, %s59
    %p66 = scmp.eq.s32.totalorder %s14, 7
    %p67 = por %p65, %p66
    %p68 = scmp.ne.s32.totalorder %s59, %s60
    %p69 = scmp.eq.s32.totalorder %s14, 0
    %p70 = por %p68, %p69
    %p71 = scmp.ne.s32.totalorder %s59, %s60
    %p72 = scmp.eq.s32.totalorder %s15, 7
    %p73 = por %p71, %p72
    %p75 = scmp.ne.s32.totalorder %s60, %s74
    %p76 = scmp.eq.s32.totalorder %s15, 0
    %p77 = por %p75, %p76
    %s79 = sadd.s32 %s78, 1
    %p82 = scmp.eq.s32.totalorder %s9, 7
    %p83 = scmp.ne.s32.totalorder %s78, %s80
    %p84 = scmp.eq.s32.totalorder %s9, 0
    %p85 = por %p83, %p84
    %p86 = scmp.ne.s32.totalorder %s78, %s80
    %p87 = scmp.eq.s32.totalorder %s14, 7
    %p88 = por %p86, %p87
    %p89 = scmp.ne.s32.totalorder %s80, %s81
    %p90 = scmp.eq.s32.totalorder %s14, 0
    %p91 = por %p89, %p90
    %p92 = scmp.ne.s32.totalorder %s80, %s81
    %p93 = scmp.eq.s32.totalorder %s15, 7
    %p94 = por %p92, %p93
    %p96 = scmp.ne.s32.totalorder %s81, %s95
    %p97 = scmp.eq.s32.totalorder %s15, 0
    %p98 = por %p96, %p97
    %s99 = ssub.s32 %s16, %s28
    %s100 = ssub.s32 %s17, %s24
    %s101 = sor.u32 %s99, %s100
    %p102 = scmp.eq.s32.totalorder %s101, 0
    %s104 = sadd.s32 %s103, 1
    %s105 = scalar_select %p102, %s103, %s104
    %p108 = pneg %p102
    %p109 = scmp.eq.s32.totalorder %s9, 7
    %p110 = por %p108, %p109
    %p111 = scmp.ne.s32.totalorder %s103, %s106
    %p112 = scmp.eq.s32.totalorder %s9, 0
    %p113 = por %p111, %p112
    %p114 = scmp.ne.s32.totalorder %s103, %s106
    %p115 = scmp.eq.s32.totalorder %s14, 7
    %p116 = por %p114, %p115
    %p117 = scmp.ne.s32.totalorder %s106, %s107
    %p118 = scmp.eq.s32.totalorder %s14, 0
    %p119 = por %p117, %p118
    %p120 = scmp.ne.s32.totalorder %s106, %s107
    %p121 = scmp.eq.s32.totalorder %s15, 7
    %p122 = por %p120, %p121
    %p124 = scmp.ne.s32.totalorder %s107, %s123
    %p125 = scmp.eq.s32.totalorder %s15, 0
    %p126 = por %p124, %p125
    %p127 = scmp.le.s32.totalorder 1, %s9
    %p128 = scmp.lt.s32.totalorder %s9, 9
    %p129 = pnand %p127, %p128
    %p130 = pneg %p129
    // Predicated region
    $region9: #{down_transition_forward.10} parent=5 // pred_check
      _
    $region10: #{down_transition_forward.10} parent=5 // pred_check_branch
      %132 = sbr.rel (%p129) target = $region12
    $region11: #{down_transition_forward.10} parent=5 // pred_region
      %s133 = ssub.s32 %s9, 1
      // Predicated region
      $region13: #{down_transition_forward.10} parent=11 // pred_check
        %p134 = pneg %p70
      $region14: #{down_transition_forward.10} parent=11 // pred_check_branch
        %136 = sbr.rel (%p134) target = $region16
      $region15: #{down_transition_forward.10} parent=11 // pred_region
        _
      $region16: #{down_transition_forward.10} parent=11 // pred_fallthru
        _
      // Predicated region
      $region17: #{down_transition_forward.10} parent=11 // pred_check
        %p137 = pneg %p91
      $region18: #{down_transition_forward.10} parent=11 // pred_check_branch
        %139 = sbr.rel (%p137) target = $region20
      $region19: #{down_transition_forward.10} parent=11 // pred_region
        _
      $region20: #{down_transition_forward.10} parent=11 // pred_fallthru
        _
    $region12: #{down_transition_forward.10} parent=5 // pred_fallthru
      _
    %p140 = scmp.lt.s32.totalorder %s9, 8
    // Predicated region
    $region21: #{down_transition_forward.10} parent=5 // pred_check
      %p141 = pneg %p140
    $region22: #{down_transition_forward.10} parent=5 // pred_check_branch
      %143 = sbr.rel (%p141) target = $region24
    $region23: #{down_transition_forward.10} parent=5 // pred_region
      // Predicated region
      $region25: #{down_transition_forward.10} parent=23 // pred_check
        %p144 = pneg %p43
      $region26: #{down_transition_forward.10} parent=23 // pred_check_branch
        %146 = sbr.rel (%p144) target = $region28
      $region27: #{down_transition_forward.10} parent=23 // pred_region
        %p147 = scmp.lt.s32.totalorder %s16, 7
        %s148 = scalar_select %p147, %s16, 7
        %p149 = scmp.lt.s32.totalorder %s17, 0
        %s150 = scalar_select %p149, %s17, 0
        %s151 = sadd.s32 %s150, %s148
        %s152 = smul.addr %s151, 8
        %s153 = scalar_lea.vmem %s0, %s152
      $region28: #{down_transition_forward.10} parent=23 // pred_fallthru
        _
    $region24: #{down_transition_forward.10} parent=5 // pred_fallthru
      _
    %p154 = scmp.le.s32.totalorder 1, %s9
    %p155 = scmp.lt.s32.totalorder %s9, 9
    %p156 = pnand %p154, %p155
    %p157 = pneg %p156
    // Predicated region
    $region29: #{down_transition_forward.10} parent=5 // pred_check
      _
    $region30: #{down_transition_forward.10} parent=5 // pred_check_branch
      %159 = sbr.rel (%p156) target = $region32
    $region31: #{down_transition_forward.10} parent=5 // pred_region
      %s160 = ssub.s32 %s9, 1
      %p161 = scmp.lt.s32.totalorder %s18, 7
      %s162 = scalar_select %p161, %s18, 7
      %p163 = scmp.lt.s32.totalorder %s19, 0
      %s164 = scalar_select %p163, %s19, 0
      %s165 = sadd.s32 %s164, %s162
      %s166 = smul.addr %s165, 8
      %s167 = scalar_lea.vmem %s0, %s166
      %p168 = pneg %p49
      %p169 = pneg %p46
      %p170 = pneg %p70
      %p171 = pneg %p67
      %p172 = pneg %p91
      %p173 = pneg %p88
      %p174 = pneg %p119
      %p175 = pneg %p116
      %p176 = scmp.lt.s32.totalorder %s18, 7
      %s177 = scalar_select %p176, %s18, 7
      %p178 = scmp.lt.s32.totalorder %s19, 0
      %s179 = scalar_select %p178, %s19, 0
      %s180 = sadd.s32 %s179, %s177
      %s181 = smul.addr %s180, 8
      %s182 = scalar_lea.vmem %s3, %s181
      %p183 = scmp.lt.s32.totalorder %s18, 7
      %s184 = scalar_select %p183, %s18, 7
      %p185 = scmp.lt.s32.totalorder %s19, 0
      %s186 = scalar_select %p185, %s19, 0
      %s187 = sadd.s32 %s186, %s184
      %s188 = smul.addr %s187, 8
      %s189 = scalar_lea.vmem %s0, %s188
      %p190 = scmp.lt.s32.totalorder %s18, 7
      %s191 = scalar_select %p190, %s18, 7
      %p192 = scmp.lt.s32.totalorder %s19, 0
      %s193 = scalar_select %p192, %s19, 0
      %s194 = sadd.s32 %s193, %s191
      %s195 = smul.addr %s194, 8
      %s196 = scalar_lea.vmem %s3, %s195
      %v197 = vld [vmem:[%s189] sm:$0xff]
      %v198 = vld [vmem:[%s1] sm:$0xff]
      %200 = vset.pattern.permute.xlu0 0
      %201 = vperm.xlu0 %200, %v198
      %v202 = vpop.permute.xlu0 %201
      %v204 = vmul.f32 %v197, %v202
      %v205 = vld [vmem:[%s2] sm:$0xff]
      %207 = vset.pattern.permute.xlu0 0
      %208 = vperm.xlu0 %207, %v205
      %v209 = vpop.permute.xlu0 %208
      %v211 = vadd.f32 %v204, %v209
      %vm212 = vcmp.gt.f32.partialorder %v211, 0.0
      %v213 = vmin.f32 %v211, 0.0
      %v214 = vmul.f32 %v213, 1.442695
      %v215 = vpow.pop %v214
      %v216 = vsub.f32 %v215, 1.0
      %v217 = vsel %vm212, %v211, %v216
      %218 = vst [vmem:[%s196] sm:$0xff] %v217
      %p219 = scmp.lt.s32.totalorder %s18, 7
      %s220 = scalar_select %p219, %s18, 7
      %p221 = scmp.lt.s32.totalorder %s19, 0
      %s222 = scalar_select %p221, %s19, 0
      %s223 = sadd.s32 %s222, %s220
      %s224 = smul.addr %s223, 8
      %s225 = scalar_lea.vmem %s3, %s224
      // Predicated region
      $region33: #{down_transition_forward.10} parent=31 // pred_check
        %p226 = pneg %p116
      $region34: #{down_transition_forward.10} parent=31 // pred_check_branch
        %228 = sbr.rel (%p226) target = $region36
      $region35: #{down_transition_forward.10} parent=31 // pred_region
        _
      $region36: #{down_transition_forward.10} parent=31 // pred_fallthru
        _
    $region32: #{down_transition_forward.10} parent=5 // pred_fallthru
      _
    %p229 = scmp.le.s32.totalorder 2, %s9
    // Predicated region
    $region37: #{down_transition_forward.10} parent=5 // pred_check
      %p230 = pneg %p229
    $region38: #{down_transition_forward.10} parent=5 // pred_check_branch
      %232 = sbr.rel (%p230) target = $region40
    $region39: #{down_transition_forward.10} parent=5 // pred_region
      %s233 = ssub.s32 %s9, 2
      // Predicated region
      $region41: #{down_transition_forward.10} parent=39 // pred_check
        %p234 = pneg %p122
      $region42: #{down_transition_forward.10} parent=39 // pred_check_branch
        %236 = sbr.rel (%p234) target = $region44
      $region43: #{down_transition_forward.10} parent=39 // pred_region
        %p237 = scmp.lt.s32.totalorder %s20, 7
        %s238 = scalar_select %p237, %s20, 7
        %p239 = scmp.lt.s32.totalorder %s21, 0
        %s240 = scalar_select %p239, %s21, 0
        %s241 = sadd.s32 %s240, %s238
        %s242 = smul.addr %s241, 8
        %s243 = scalar_lea.vmem %s3, %s242
      $region44: #{down_transition_forward.10} parent=39 // pred_fallthru
        _
    $region40: #{down_transition_forward.10} parent=5 // pred_fallthru
      _
  $region6: #{down_transition_forward.10} parent=0 // loop_footer
    %s13 = sadd.s32 1, %s9
  $region7: #{down_transition_forward.10} parent=0 // loop_footer_branch
    %8 = sbr.rel target = $region3
  $region8: #{down_transition_forward.10} parent=0 // loop_exit
    _

// kernel: down_transition_forward.9
$region0: #{down_transition_forward.9}
  #allocation0 [shape = 'u32[]', space=smem, size = 0x4, offset = 0x4, fixed_abs, tag = 'smem constant byte address 0x4 - core index']
  #allocation1 [shape = 'u32[144,128]{1,0:T(1,128)}', space=vmem, size = 0x12000, scoped, tag = 'internal scratch']
  #allocation2 [shape = 'f32[200,128]{1,0:T(8,128)}', space=vmem, size = 0x19000, scoped, tag = 'scratch operand']
  #allocation3 [shape = 'f32[8,128]{1,0:T(8,128)}', space=vmem, size = 0x1000, scoped, tag = 'scratch operand']
  %s0 = inlined_call_operand.vmem [shape: f32[2,8,8,256], index: 0, kind: input, shape index: {}]
  %s1 = inlined_call_operand.vmem [shape: f32[5,8,200], index: 1, kind: input, shape index: {}]
  %s2 = inlined_call_operand.vmem [shape: f32[8,1], index: 2, kind: input, shape index: {}]
  %s3 = inlined_call_operand.vmem [shape: f32[2,4,8,128], index: 3, kind: output, shape index: {0}]
  %s4 = inlined_call_operand.vmem [shape: f32[2,4,8,1], index: 4, kind: output, shape index: {1}]
  %s5 = inlined_call_operand.vmem [shape: f32[2,4,8,1], index: 5, kind: output, shape index: {2}]
  %6 = xla_tuple %s3, %s4, %s5
  %s7 = sld [smem:[#allocation0]]
  $region69: #{down_transition_forward.9} parent=0
    _
  %s9 = ssub.s32 1, %s7
  %s10 = scalar_select 0, %s9, %s7
  loop: start=0, step=1, limit=42
  $region2: #{down_transition_forward.9} parent=0 // loop_pre_header
    _
  $region3: #{down_transition_forward.9} parent=0 // loop_header
    %s12 = sphi 0, %s16
    %p13 = scmp.ge.s32.totalorder %s12, 42
    %s19 = sphi 0, %s38
    %s20 = sphi 0, %s34
    %s21 = sphi 0, %s30
    %s22 = sphi 0, %s19
    %s23 = sphi 0, %s20
    %s24 = sphi 0, %s21
    %s25 = sphi 0, %s22
    %s26 = sphi 0, %s23
    %s27 = sphi 0, %s24
    %s45 = sphi 0, %s47
    %s48 = sphi 0, %s45
    %s49 = sphi 0, %s48
    %s65 = sphi 0, %s49
    %s71 = sphi 0, %s73
    %s74 = sphi 0, %s71
    %s75 = sphi 0, %s74
    %s91 = sphi 0, %s75
    %s95 = sphi 0, %s95
    %s97 = sphi 0, %s95
    %s98 = sphi 0, %s97
    %s112 = sphi 0, %s98
    %s120 = sphi 0, %s122
    %s123 = sphi 0, %s120
    %s124 = sphi 0, %s123
    %s140 = sphi 0, %s124
    %s148 = sphi 0, %s150
    %s151 = sphi 0, %s148
    %s152 = sphi 0, %s151
    %s168 = sphi 0, %s152
    %s176 = sphi 0, %s178
    %s179 = sphi 0, %s176
    %s180 = sphi 0, %s179
    %s196 = sphi 0, %s180
  $region4: #{down_transition_forward.9} parent=0 // loop_header_branch
    %15 = sbr.rel (%p13) target = $region8
  $region5: #{down_transition_forward.9} parent=0 // loop_body
    %s17 = ssub.s32 %s12, 1
    %s18 = ssub.s32 %s12, 2
    %s28 = sadd.s32 1, %s21
    %p29 = scmp.ge.s32.totalorder %s28, 5
    %s30 = scalar_select %p29, 0, %s28
    %s31 = sadd.s32 1, %s20
    %s32 = scalar_select %p29, %s31, %s20
    %p33 = scmp.ge.s32.totalorder %s32, 4
    %s34 = scalar_select %p33, 0, %s32
    %s35 = sadd.s32 1, %s19
    %s36 = scalar_select %p33, %s35, %s19
    %p37 = scmp.ge.s32.totalorder %s36, 2
    %s38 = scalar_select %p37, 0, %s36
    %s39 = sadd.s32 %s20, %s21
    %s40 = sadd.s32 %s34, %s30
    %s41 = ssub.s32 %s19, %s38
    %s42 = ssub.s32 %s39, %s40
    %s43 = sor.u32 %s41, %s42
    %p44 = scmp.eq.s32.totalorder %s43, 0
    %s46 = sadd.s32 %s45, 1
    %s47 = scalar_select %p44, %s45, %s46
    %p50 = pneg %p44
    %p51 = scmp.eq.s32.totalorder %s12, 39
    %p52 = por %p50, %p51
    %p53 = scmp.ne.s32.totalorder %s45, %s48
    %p54 = scmp.eq.s32.totalorder %s12, 0
    %p55 = por %p53, %p54
    %p56 = scmp.ne.s32.totalorder %s45, %s48
    %p57 = scmp.eq.s32.totalorder %s17, 39
    %p58 = por %p56, %p57
    %p59 = scmp.ne.s32.totalorder %s48, %s49
    %p60 = scmp.eq.s32.totalorder %s17, 0
    %p61 = por %p59, %p60
    %p62 = scmp.ne.s32.totalorder %s48, %s49
    %p63 = scmp.eq.s32.totalorder %s18, 39
    %p64 = por %p62, %p63
    %p66 = scmp.ne.s32.totalorder %s49, %s65
    %p67 = scmp.eq.s32.totalorder %s18, 0
    %p68 = por %p66, %p67
    %s69 = ssub.s32 %s21, %s30
    %p70 = scmp.eq.s32.totalorder %s69, 0
    %s72 = sadd.s32 %s71, 1
    %s73 = scalar_select %p70, %s71, %s72
    %p76 = pneg %p70
    %p77 = scmp.eq.s32.totalorder %s12, 39
    %p78 = por %p76, %p77
    %p79 = scmp.ne.s32.totalorder %s71, %s74
    %p80 = scmp.eq.s32.totalorder %s12, 0
    %p81 = por %p79, %p80
    %p82 = scmp.ne.s32.totalorder %s71, %s74
    %p83 = scmp.eq.s32.totalorder %s17, 39
    %p84 = por %p82, %p83
    %p85 = scmp.ne.s32.totalorder %s74, %s75
    %p86 = scmp.eq.s32.totalorder %s17, 0
    %p87 = por %p85, %p86
    %p88 = scmp.ne.s32.totalorder %s74, %s75
    %p89 = scmp.eq.s32.totalorder %s18, 39
    %p90 = por %p88, %p89
    %p92 = scmp.ne.s32.totalorder %s75, %s91
    %p93 = scmp.eq.s32.totalorder %s18, 0
    %p94 = por %p92, %p93
    %s96 = sadd.s32 %s95, 1
    %p99 = scmp.eq.s32.totalorder %s12, 39
    %p100 = scmp.ne.s32.totalorder %s95, %s97
    %p101 = scmp.eq.s32.totalorder %s12, 0
    %p102 = por %p100, %p101
    %p103 = scmp.ne.s32.totalorder %s95, %s97
    %p104 = scmp.eq.s32.totalorder %s17, 39
    %p105 = por %p103, %p104
    %p106 = scmp.ne.s32.totalorder %s97, %s98
    %p107 = scmp.eq.s32.totalorder %s17, 0
    %p108 = por %p106, %p107
    %p109 = scmp.ne.s32.totalorder %s97, %s98
    %p110 = scmp.eq.s32.totalorder %s18, 39
    %p111 = por %p109, %p110
    %p113 = scmp.ne.s32.totalorder %s98, %s112
    %p114 = scmp.eq.s32.totalorder %s18, 0
    %p115 = por %p113, %p114
    %s116 = ssub.s32 %s19, %s38
    %s117 = ssub.s32 %s20, %s34
    %s118 = sor.u32 %s116, %s117
    %p119 = scmp.eq.s32.totalorder %s118, 0
    %s121 = sadd.s32 %s120, 1
    %s122 = scalar_select %p119, %s120, %s121
    %p125 = pneg %p119
    %p126 = scmp.eq.s32.totalorder %s12, 39
    %p127 = por %p125, %p126
    %p128 = scmp.ne.s32.totalorder %s120, %s123
    %p129 = scmp.eq.s32.totalorder %s12, 0
    %p130 = por %p128, %p129
    %p131 = scmp.ne.s32.totalorder %s120, %s123
    %p132 = scmp.eq.s32.totalorder %s17, 39
    %p133 = por %p131, %p132
    %p134 = scmp.ne.s32.totalorder %s123, %s124
    %p135 = scmp.eq.s32.totalorder %s17, 0
    %p136 = por %p134, %p135
    %p137 = scmp.ne.s32.totalorder %s123, %s124
    %p138 = scmp.eq.s32.totalorder %s18, 39
    %p139 = por %p137, %p138
    %p141 = scmp.ne.s32.totalorder %s124, %s140
    %p142 = scmp.eq.s32.totalorder %s18, 0
    %p143 = por %p141, %p142
    %s144 = ssub.s32 %s19, %s38
    %s145 = ssub.s32 %s20, %s34
    %s146 = sor.u32 %s144, %s145
    %p147 = scmp.eq.s32.totalorder %s146, 0
    %s149 = sadd.s32 %s148, 1
    %s150 = scalar_select %p147, %s148, %s149
    %p153 = pneg %p147
    %p154 = scmp.eq.s32.totalorder %s12, 39
    %p155 = por %p153, %p154
    %p156 = scmp.ne.s32.totalorder %s148, %s151
    %p157 = scmp.eq.s32.totalorder %s12, 0
    %p158 = por %p156, %p157
    %p159 = scmp.ne.s32.totalorder %s148, %s151
    %p160 = scmp.eq.s32.totalorder %s17, 39
    %p161 = por %p159, %p160
    %p162 = scmp.ne.s32.totalorder %s151, %s152
    %p163 = scmp.eq.s32.totalorder %s17, 0
    %p164 = por %p162, %p163
    %p165 = scmp.ne.s32.totalorder %s151, %s152
    %p166 = scmp.eq.s32.totalorder %s18, 39
    %p167 = por %p165, %p166
    %p169 = scmp.ne.s32.totalorder %s152, %s168
    %p170 = scmp.eq.s32.totalorder %s18, 0
    %p171 = por %p169, %p170
    %s172 = ssub.s32 %s19, %s38
    %s173 = ssub.s32 %s20, %s34
    %s174 = sor.u32 %s172, %s173
    %p175 = scmp.eq.s32.totalorder %s174, 0
    %s177 = sadd.s32 %s176, 1
    %s178 = scalar_select %p175, %s176, %s177
    %p181 = pneg %p175
    %p182 = scmp.eq.s32.totalorder %s12, 39
    %p183 = por %p181, %p182
    %p184 = scmp.ne.s32.totalorder %s176, %s179
    %p185 = scmp.eq.s32.totalorder %s12, 0
    %p186 = por %p184, %p185
    %p187 = scmp.ne.s32.totalorder %s176, %s179
    %p188 = scmp.eq.s32.totalorder %s17, 39
    %p189 = por %p187, %p188
    %p190 = scmp.ne.s32.totalorder %s179, %s180
    %p191 = scmp.eq.s32.totalorder %s17, 0
    %p192 = por %p190, %p191
    %p193 = scmp.ne.s32.totalorder %s179, %s180
    %p194 = scmp.eq.s32.totalorder %s18, 39
    %p195 = por %p193, %p194
    %p197 = scmp.ne.s32.totalorder %s180, %s196
    %p198 = scmp.eq.s32.totalorder %s18, 0
    %p199 = por %p197, %p198
    %p200 = scmp.le.s32.totalorder 1, %s12
    %p201 = scmp.lt.s32.totalorder %s12, 41
    %p202 = pnand %p200, %p201
    %p203 = pneg %p202
    // Predicated region
    $region9: #{down_transition_forward.9} parent=5 // pred_check
      _
    $region10: #{down_transition_forward.9} parent=5 // pred_check_branch
      %205 = sbr.rel (%p202) target = $region12
    $region11: #{down_transition_forward.9} parent=5 // pred_region
      %s206 = ssub.s32 %s12, 1
      // Predicated region
      $region13: #{down_transition_forward.9} parent=11 // pred_check
        %p207 = pneg %p108
      $region14: #{down_transition_forward.9} parent=11 // pred_check_branch
        %209 = sbr.rel (%p207) target = $region16
      $region15: #{down_transition_forward.9} parent=11 // pred_region
        _
      $region16: #{down_transition_forward.9} parent=11 // pred_fallthru
        _
    $region12: #{down_transition_forward.9} parent=5 // pred_fallthru
      _
    %p210 = scmp.lt.s32.totalorder %s12, 40
    // Predicated region
    $region17: #{down_transition_forward.9} parent=5 // pred_check
      %p211 = pneg %p210
    $region18: #{down_transition_forward.9} parent=5 // pred_check_branch
      %213 = sbr.rel (%p211) target = $region20
    $region19: #{down_transition_forward.9} parent=5 // pred_region
      // Predicated region
      $region21: #{down_transition_forward.9} parent=19 // pred_check
        %p214 = pneg %p55
      $region22: #{down_transition_forward.9} parent=19 // pred_check_branch
        %216 = sbr.rel (%p214) target = $region24
      $region23: #{down_transition_forward.9} parent=19 // pred_region
        %s217 = sadd.s32 %s20, %s21
        %p218 = scmp.lt.s32.totalorder %s19, 1
        %s219 = scalar_select %p218, %s19, 1
        %p220 = scmp.lt.s32.totalorder %s217, 7
        %s221 = scalar_select %p220, %s217, 7
        %s222 = smul.addr %s221, 2
        %s223 = smul.addr %s219, 16
        %s224 = sadd.s32 %s222, %s223
        %s225 = smul.addr %s224, 8
        %s226 = scalar_lea.vmem %s0, %s225
        %s227 = sadd.s32 %s20, %s21
      $region24: #{down_transition_forward.9} parent=19 // pred_fallthru
        _
      // Predicated region
      $region25: #{down_transition_forward.9} parent=19 // pred_check
        %p228 = pneg %p81
      $region26: #{down_transition_forward.9} parent=19 // pred_check_branch
        %230 = sbr.rel (%p228) target = $region28
      $region27: #{down_transition_forward.9} parent=19 // pred_region
        %p231 = scmp.lt.s32.totalorder %s21, 4
        %s232 = scalar_select %p231, %s21, 4
        %s233 = smul.addr %s232, 2
        %s234 = smul.addr %s233, 8
        %s235 = scalar_lea.vmem %s1, %s234
      $region28: #{down_transition_forward.9} parent=19 // pred_fallthru
        _
    $region20: #{down_transition_forward.9} parent=5 // pred_fallthru
      _
    %p236 = scmp.le.s32.totalorder 1, %s12
    %p237 = scmp.lt.s32.totalorder %s12, 41
    %p238 = pnand %p236, %p237
    %p239 = pneg %p238
    // Predicated region
    $region29: #{down_transition_forward.9} parent=5 // pred_check
      _
    $region30: #{down_transition_forward.9} parent=5 // pred_check_branch
      %241 = sbr.rel (%p238) target = $region32
    $region31: #{down_transition_forward.9} parent=5 // pred_region
      %s242 = ssub.s32 %s12, 1
      %s243 = sadd.s32 %s23, %s24
      %p244 = scmp.lt.s32.totalorder %s22, 1
      %s245 = scalar_select %p244, %s22, 1
      %p246 = scmp.lt.s32.totalorder %s243, 7
      %s247 = scalar_select %p246, %s243, 7
      %s248 = smul.addr %s247, 2
      %s249 = smul.addr %s245, 16
      %s250 = sadd.s32 %s248, %s249
      %s251 = smul.addr %s250, 8
      %s252 = scalar_lea.vmem %s0, %s251
      %p253 = pneg %p61
      %p254 = pneg %p58
      %p255 = scmp.lt.s32.totalorder %s24, 4
      %s256 = scalar_select %p255, %s24, 4
      %s257 = smul.addr %s256, 2
      %s258 = smul.addr %s257, 8
      %s259 = scalar_lea.vmem %s1, %s258
      %p260 = pneg %p87
      %p261 = pneg %p84
      %p262 = pneg %p108
      %p263 = pneg %p105
      %p264 = pneg %p136
      %p265 = pneg %p133
      %p266 = scmp.lt.s32.totalorder %s22, 1
      %s267 = scalar_select %p266, %s22, 1
      %p268 = scmp.lt.s32.totalorder %s23, 3
      %s269 = scalar_select %p268, %s23, 3
      %s270 = smul.addr %s267, 4
      %s271 = sadd.s32 %s269, %s270
      %s272 = smul.addr %s271, 8
      %s273 = scalar_lea.vmem %s3, %s272
      %p274 = pneg %p164
      %p275 = pneg %p161
      %p276 = scmp.lt.s32.totalorder %s22, 1
      %s277 = scalar_select %p276, %s22, 1
      %p278 = scmp.lt.s32.totalorder %s23, 3
      %s279 = scalar_select %p278, %s23, 3
      %s280 = smul.addr %s277, 4
      %s281 = sadd.s32 %s279, %s280
      %s282 = smul.addr %s281, 8
      %s283 = scalar_lea.vmem %s4, %s282
      %p284 = pneg %p192
      %p285 = pneg %p189
      %p286 = scmp.lt.s32.totalorder %s22, 1
      %s287 = scalar_select %p286, %s22, 1
      %p288 = scmp.lt.s32.totalorder %s23, 3
      %s289 = scalar_select %p288, %s23, 3
      %s290 = smul.addr %s287, 4
      %s291 = sadd.s32 %s289, %s290
      %s292 = smul.addr %s291, 8
      %s293 = scalar_lea.vmem %s5, %s292
      %s294 = sadd.s32 %s23, %s24
      %p295 = scmp.lt.s32.totalorder %s22, 1
      %s296 = scalar_select %p295, %s22, 1
      %p297 = scmp.lt.s32.totalorder %s294, 7
      %s298 = scalar_select %p297, %s294, 7
      %s299 = smul.addr %s298, 2
      %s300 = smul.addr %s296, 16
      %s301 = sadd.s32 %s299, %s300
      %s302 = smul.addr %s301, 8
      %s303 = scalar_lea.vmem %s0, %s302
      %s304 = sadd.s32 %s23, %s24
      %p305 = scmp.lt.s32.totalorder %s24, 4
      %s306 = scalar_select %p305, %s24, 4
      %s307 = smul.addr %s306, 2
      %s308 = smul.addr %s307, 8
      %s309 = scalar_lea.vmem %s1, %s308
      %p310 = scmp.lt.s32.totalorder %s22, 1
      %s311 = scalar_select %p310, %s22, 1
      %p312 = scmp.lt.s32.totalorder %s23, 3
      %s313 = scalar_select %p312, %s23, 3
      %s314 = smul.addr %s311, 4
      %s315 = sadd.s32 %s313, %s314
      %s316 = smul.addr %s315, 8
      %s317 = scalar_lea.vmem %s3, %s316
      %p318 = scmp.lt.s32.totalorder %s22, 1
      %s319 = scalar_select %p318, %s22, 1
      %p320 = scmp.lt.s32.totalorder %s23, 3
      %s321 = scalar_select %p320, %s23, 3
      %s322 = smul.addr %s319, 4
      %s323 = sadd.s32 %s321, %s322
      %s324 = smul.addr %s323, 8
      %s325 = scalar_lea.vmem %s4, %s324
      %p326 = scmp.lt.s32.totalorder %s22, 1
      %s327 = scalar_select %p326, %s22, 1
      %p328 = scmp.lt.s32.totalorder %s23, 3
      %s329 = scalar_select %p328, %s23, 3
      %s330 = smul.addr %s327, 4
      %s331 = sadd.s32 %s329, %s330
      %s332 = smul.addr %s331, 8
      %s333 = scalar_lea.vmem %s5, %s332
      %v334 = vld [vmem:[%s303] sm:$0xff]
      %335 = vst [vmem:[#allocation2] sm:$0xff] %v334
      %v336 = vld [vmem:[%s303] sm:$0xff]
      %v337 = vld [vmem:[%s303 + $0x8] sm:$0xff]
      %340 = vrot.lane.b32.xlu0 %v336, 127
      %v341 = vpop.permute.xlu0 %340
      %342 = vrot.lane.b32.xlu0 %v337, 127
      %v343 = vpop.permute.xlu0 %342
      %vm344 = vcmask 1039360
      %v345 = vsel %vm344, %v341, %v343
      %347 = vst [vmem:[#allocation2 + $0x8] sm:$0xff] %v345
      %v348 = vld [vmem:[%s303] sm:$0xff]
      %v349 = vld [vmem:[%s303 + $0x8] sm:$0xff]
      %352 = vrot.lane.b32.xlu0 %v348, 126
      %v353 = vpop.permute.xlu0 %352
      %354 = vrot.lane.b32.xlu0 %v349, 126
      %v355 = vpop.permute.xlu0 %354
      %vm356 = vcmask 1031168
      %v357 = vsel %vm356, %v353, %v355
      %359 = vst [vmem:[#allocation2 + $0x10] sm:$0xff] %v357
      %v360 = vld [vmem:[%s303] sm:$0xff]
      %v361 = vld [vmem:[%s303 + $0x8] sm:$0xff]
      %364 = vrot.lane.b32.xlu0 %v360, 125
      %v365 = vpop.permute.xlu0 %364
      %366 = vrot.lane.b32.xlu0 %v361, 125
      %v367 = vpop.permute.xlu0 %366
      %vm368 = vcmask 1022976
      %v369 = vsel %vm368, %v365, %v367
      %371 = vst [vmem:[#allocation2 + $0x18] sm:$0xff] %v369
      %v372 = vld [vmem:[%s303] sm:$0xff]
      %v373 = vld [vmem:[%s303 + $0x8] sm:$0xff]
      %376 = vrot.lane.b32.xlu0 %v372, 124
      %v377 = vpop.permute.xlu0 %376
      %378 = vrot.lane.b32.xlu0 %v373, 124
      %v379 = vpop.permute.xlu0 %378
      %vm380 = vcmask 1014784
      %v381 = vsel %vm380, %v377, %v379
      %383 = vst [vmem:[#allocation2 + $0x20] sm:$0xff] %v381
      %v384 = vld [vmem:[%s303] sm:$0xff]
      %v385 = vld [vmem:[%s303 + $0x8] sm:$0xff]
      %388 = vrot.lane.b32.xlu0 %v384, 120
      %v389 = vpop.permute.xlu0 %388
      %390 = vrot.lane.b32.xlu0 %v385, 120
      %v391 = vpop.permute.xlu0 %390
      %vm392 = vcmask 982016
      %v393 = vsel %vm392, %v389, %v391
      %395 = vst [vmem:[#allocation2 + $0x28] sm:$0xff] %v393
      %v396 = vld [vmem:[%s303] sm:$0xff]
      %v397 = vld [vmem:[%s303 + $0x8] sm:$0xff]
      %400 = vrot.lane.b32.xlu0 %v396, 119
      %v401 = vpop.permute.xlu0 %400
      %402 = vrot.lane.b32.xlu0 %v397, 119
      %v403 = vpop.permute.xlu0 %402
      %vm404 = vcmask 973824
      %v405 = vsel %vm404, %v401, %v403
      %407 = vst [vmem:[#allocation2 + $0x30] sm:$0xff] %v405
      %v408 = vld [vmem:[%s303] sm:$0xff]
      %v409 = vld [vmem:[%s303 + $0x8] sm:$0xff]
      %412 = vrot.lane.b32.xlu0 %v408, 118
      %v413 = vpop.permute.xlu0 %412
      %414 = vrot.lane.b32.xlu0 %v409, 118
      %v415 = vpop.permute.xlu0 %414
      %vm416 = vcmask 965632
      %v417 = vsel %vm416, %v413, %v415
      %419 = vst [vmem:[#allocation2 + $0x38] sm:$0xff] %v417
      %v420 = vld [vmem:[%s303] sm:$0xff]
      %v421 = vld [vmem:[%s303 + $0x8] sm:$0xff]
      %424 = vrot.lane.b32.xlu0 %v420, 117
      %v425 = vpop.permute.xlu0 %424
      %426 = vrot.lane.b32.xlu0 %v421, 117
      %v427 = vpop.permute.xlu0 %426
      %vm428 = vcmask 957440
      %v429 = vsel %vm428, %v425, %v427
      %431 = vst [vmem:[#allocation2 + $0x40] sm:$0xff] %v429
      %v432 = vld [vmem:[%s303] sm:$0xff]
      %v433 = vld [vmem:[%s303 + $0x8] sm:$0xff]
      %436 = vrot.lane.b32.xlu0 %v432, 116
      %v437 = vpop.permute.xlu0 %436
      %438 = vrot.lane.b32.xlu0 %v433, 116
      %v439 = vpop.permute.xlu0 %438
      %vm440 = vcmask 949248
      %v441 = vsel %vm440, %v437, %v439
      %443 = vst [vmem:[#allocation2 + $0x48] sm:$0xff] %v441
      %v444 = vld [vmem:[%s303] sm:$0xff]
      %v445 = vld [vmem:[%s303 + $0x8] sm:$0xff]
      %448 = vrot.lane.b32.xlu0 %v444, 112
      %v449 = vpop.permute.xlu0 %448
      %450 = vrot.lane.b32.xlu0 %v445, 112
      %v451 = vpop.permute.xlu0 %450
      %vm452 = vcmask 916480
      %v453 = vsel %vm452, %v449, %v451
      %455 = vst [vmem:[#allocation2 + $0x50] sm:$0xff] %v453
      %v456 = vld [vmem:[%s303] sm:$0xff]
      %v457 = vld [vmem:[%s303 + $0x8] sm:$0xff]
      %460 = vrot.lane.b32.xlu0 %v456, 111
      %v461 = vpop.permute.xlu0 %460
      %462 = vrot.lane.b32.xlu0 %v457, 111
      %v463 = vpop.permute.xlu0 %462
      %vm464 = vcmask 908288
      %v465 = vsel %vm464, %v461, %v463
      %467 = vst [vmem:[#allocation2 + $0x58] sm:$0xff] %v465
      %v468 = vld [vmem:[%s303] sm:$0xff]
      %v469 = vld [vmem:[%s303 + $0x8] sm:$0xff]
      %472 = vrot.lane.b32.xlu0 %v468, 110
      %v473 = vpop.permute.xlu0 %472
      %474 = vrot.lane.b32.xlu0 %v469, 110
      %v475 = vpop.permute.xlu0 %474
      %vm476 = vcmask 900096
      %v477 = vsel %vm476, %v473, %v475
      %479 = vst [vmem:[#allocation2 + $0x60] sm:$0xff] %v477
      %v480 = vld [vmem:[%s303] sm:$0xff]
      %v481 = vld [vmem:[%s303 + $0x8] sm:$0xff]
      %484 = vrot.lane.b32.xlu0 %v480, 109
      %v485 = vpop.permute.xlu0 %484
      %486 = vrot.lane.b32.xlu0 %v481, 109
      %v487 = vpop.permute.xlu0 %486
      %vm488 = vcmask 891904
      %v489 = vsel %vm488, %v485, %v487
      %491 = vst [vmem:[#allocation2 + $0x68] sm:$0xff] %v489
      %v492 = vld [vmem:[%s303] sm:$0xff]
      %v493 = vld [vmem:[%s303 + $0x8] sm:$0xff]
      %496 = vrot.lane.b32.xlu0 %v492, 108
      %v497 = vpop.permute.xlu0 %496
      %498 = vrot.lane.b32.xlu0 %v493, 108
      %v499 = vpop.permute.xlu0 %498
      %vm500 = vcmask 883712
      %v501 = vsel %vm500, %v497, %v499
      %503 = vst [vmem:[#allocation2 + $0x70] sm:$0xff] %v501
      %v504 = vld [vmem:[%s303] sm:$0xff]
      %v505 = vld [vmem:[%s303 + $0x8] sm:$0xff]
      %508 = vrot.lane.b32.xlu0 %v504, 104
      %v509 = vpop.permute.xlu0 %508
      %510 = vrot.lane.b32.xlu0 %v505, 104
      %v511 = vpop.permute.xlu0 %510
      %vm512 = vcmask 850944
      %v513 = vsel %vm512, %v509, %v511
      %515 = vst [vmem:[#allocation2 + $0x78] sm:$0xff] %v513
      %v516 = vld [vmem:[%s303] sm:$0xff]
      %v517 = vld [vmem:[%s303 + $0x8] sm:$0xff]
      %520 = vrot.lane.b32.xlu0 %v516, 103
      %v521 = vpop.permute.xlu0 %520
      %522 = vrot.lane.b32.xlu0 %v517, 103
      %v523 = vpop.permute.xlu0 %522
      %vm524 = vcmask 842752
      %v525 = vsel %vm524, %v521, %v523
      %527 = vst [vmem:[#allocation2 + $0x80] sm:$0xff] %v525
      %v528 = vld [vmem:[%s303] sm:$0xff]
      %v529 = vld [vmem:[%s303 + $0x8] sm:$0xff]
      %532 = vrot.lane.b32.xlu0 %v528, 102
      %v533 = vpop.permute.xlu0 %532
      %534 = vrot.lane.b32.xlu0 %v529, 102
      %v535 = vpop.permute.xlu0 %534
      %vm536 = vcmask 834560
      %v537 = vsel %vm536, %v533, %v535
      %539 = vst [vmem:[#allocation2 + $0x88] sm:$0xff] %v537
      %v540 = vld [vmem:[%s303] sm:$0xff]
      %v541 = vld [vmem:[%s303 + $0x8] sm:$0xff]
      %544 = vrot.lane.b32.xlu0 %v540, 101
      %v545 = vpop.permute.xlu0 %544
      %546 = vrot.lane.b32.xlu0 %v541, 101
      %v547 = vpop.permute.xlu0 %546
      %vm548 = vcmask 826368
      %v549 = vsel %vm548, %v545, %v547
      %551 = vst [vmem:[#allocation2 + $0x90] sm:$0xff] %v549
      %v552 = vld [vmem:[%s303] sm:$0xff]
      %v553 = vld [vmem:[%s303 + $0x8] sm:$0xff]
      %556 = vrot.lane.b32.xlu0 %v552, 100
      %v557 = vpop.permute.xlu0 %556
      %558 = vrot.lane.b32.xlu0 %v553, 100
      %v559 = vpop.permute.xlu0 %558
      %vm560 = vcmask 818176
      %v561 = vsel %vm560, %v557, %v559
      %563 = vst [vmem:[#allocation2 + $0x98] sm:$0xff] %v561
      %v564 = vld [vmem:[%s303] sm:$0xff]
      %v565 = vld [vmem:[%s303 + $0x8] sm:$0xff]
      %568 = vrot.lane.b32.xlu0 %v564, 96
      %v569 = vpop.permute.xlu0 %568
      %570 = vrot.lane.b32.xlu0 %v565, 96
      %v571 = vpop.permute.xlu0 %570
      %vm572 = vcmask 785408
      %v573 = vsel %vm572, %v569, %v571
      %575 = vst [vmem:[#allocation2 + $0xa0] sm:$0xff] %v573
      %v576 = vld [vmem:[%s303] sm:$0xff]
      %v577 = vld [vmem:[%s303 + $0x8] sm:$0xff]
      %580 = vrot.lane.b32.xlu0 %v576, 95
      %v581 = vpop.permute.xlu0 %580
      %582 = vrot.lane.b32.xlu0 %v577, 95
      %v583 = vpop.permute.xlu0 %582
      %vm584 = vcmask 777216
      %v585 = vsel %vm584, %v581, %v583
      %587 = vst [vmem:[#allocation2 + $0xa8] sm:$0xff] %v585
      %v588 = vld [vmem:[%s303] sm:$0xff]
      %v589 = vld [vmem:[%s303 + $0x8] sm:$0xff]
      %592 = vrot.lane.b32.xlu0 %v588, 94
      %v593 = vpop.permute.xlu0 %592
      %594 = vrot.lane.b32.xlu0 %v589, 94
      %v595 = vpop.permute.xlu0 %594
      %vm596 = vcmask 769024
      %v597 = vsel %vm596, %v593, %v595
      %599 = vst [vmem:[#allocation2 + $0xb0] sm:$0xff] %v597
      %v600 = vld [vmem:[%s303] sm:$0xff]
      %v601 = vld [vmem:[%s303 + $0x8] sm:$0xff]
      %604 = vrot.lane.b32.xlu0 %v600, 93
      %v605 = vpop.permute.xlu0 %604
      %606 = vrot.lane.b32.xlu0 %v601, 93
      %v607 = vpop.permute.xlu0 %606
      %vm608 = vcmask 760832
      %v609 = vsel %vm608, %v605, %v607
      %611 = vst [vmem:[#allocation2 + $0xb8] sm:$0xff] %v609
      %v612 = vld [vmem:[%s303] sm:$0xff]
      %v613 = vld [vmem:[%s303 + $0x8] sm:$0xff]
      %616 = vrot.lane.b32.xlu0 %v612, 92
      %v617 = vpop.permute.xlu0 %616
      %618 = vrot.lane.b32.xlu0 %v613, 92
      %v619 = vpop.permute.xlu0 %618
      %vm620 = vcmask 752640
      %v621 = vsel %vm620, %v617, %v619
      %623 = vst [vmem:[#allocation2 + $0xc0] sm:$0xff] %v621
      %p624 = scmp.eq.s32.totalorder %s24, 0
      // Predicated region
      $region33: #{down_transition_forward.9} parent=31 // pred_check
        %p625 = pneg %p624
      $region34: #{down_transition_forward.9} parent=31 // pred_check_branch
        %627 = sbr.rel (%p625) target = $region36
      $region35: #{down_transition_forward.9} parent=31 // pred_region
        %v628 = vld [vmem:[%s2] sm:$0xff]
        %630 = vset.pattern.permute.xlu0 0
        %631 = vperm.xlu0 %630, %v628
        %v632 = vpop.permute.xlu0 %631
        %634 = vst [vmem:[#allocation3] sm:$0xff] %v632
      $region36: #{down_transition_forward.9} parent=31 // pred_fallthru
        _
      %v635 = vld [vmem:[#allocation3] sm:$0xff]
      %v636 = vld [vmem:[%s309] sm:$0xff]
      %v637 = vld [vmem:[%s309 + $0x8] sm:$0xff]
      %v638 = vld [vmem:[#allocation2] sm:$0xff]
      %v639 = vld [vmem:[#allocation2 + $0x8] sm:$0xff]
      %v640 = vld [vmem:[#allocation2 + $0x10] sm:$0xff]
      %v641 = vld [vmem:[#allocation2 + $0x18] sm:$0xff]
      %v642 = vld [vmem:[#allocation2 + $0x20] sm:$0xff]
      %v643 = vld [vmem:[#allocation2 + $0x28] sm:$0xff]
      %v644 = vld [vmem:[#allocation2 + $0x30] sm:$0xff]
      %v645 = vld [vmem:[#allocation2 + $0x38] sm:$0xff]
      %v646 = vld [vmem:[#allocation2 + $0x40] sm:$0xff]
      %v647 = vld [vmem:[#allocation2 + $0x48] sm:$0xff]
      %v648 = vld [vmem:[#allocation2 + $0x50] sm:$0xff]
      %v649 = vld [vmem:[#allocation2 + $0x58] sm:$0xff]
      %v650 = vld [vmem:[#allocation2 + $0x60] sm:$0xff]
      %v651 = vld [vmem:[#allocation2 + $0x68] sm:$0xff]
      %v652 = vld [vmem:[#allocation2 + $0x70] sm:$0xff]
      %v653 = vld [vmem:[#allocation2 + $0x78] sm:$0xff]
      %v654 = vld [vmem:[#allocation2 + $0x80] sm:$0xff]
      %v655 = vld [vmem:[#allocation2 + $0x88] sm:$0xff]
      %v656 = vld [vmem:[#allocation2 + $0x90] sm:$0xff]
      %v657 = vld [vmem:[#allocation2 + $0x98] sm:$0xff]
      %v658 = vld [vmem:[#allocation2 + $0xa0] sm:$0xff]
      %v659 = vld [vmem:[#allocation2 + $0xa8] sm:$0xff]
      %v660 = vld [vmem:[#allocation2 + $0xb0] sm:$0xff]
      %v661 = vld [vmem:[#allocation2 + $0xb8] sm:$0xff]
      %v662 = vld [vmem:[#allocation2 + $0xc0] sm:$0xff]
      %vm663 = vcmask 588800
      %v665 = vsel %vm663, %v637, 0
      %667 = vmatprep.subr.mxu0 0.0
      %668 = vmatpush1.msra.mxu0 %v653
      %669 = vmatprep.subr.mxu0 0.0
      %670 = vmatpush1.msra.mxu0 %v652
      %671 = vmatprep.subr.mxu0 0.0
      %672 = vmatpush1.msra.mxu0 %v651
      %673 = vmatprep.subr.mxu0 0.0
      %674 = vmatpush1.msra.mxu0 %v650
      %675 = vmatprep.subr.mxu0 0.0
      %676 = vmatpush1.msra.mxu0 %v649
      %677 = vmatprep.subr.mxu0 0.0
      %678 = vmatpush1.msra.mxu0 %v648
      %679 = vmatprep.subr.mxu0 0.0
      %680 = vmatpush1.msra.mxu0 %v647
      %681 = vmatprep.subr.mxu0 0.0
      %682 = vmatpush1.msra.mxu0 %v646
      %683 = vmatprep.subr.mxu0 0.0
      %684 = vmatpush1.msra.mxu0 %v645
      %685 = vmatprep.subr.mxu0 0.0
      %686 = vmatpush1.msra.mxu0 %v644
      %687 = vmatprep.subr.mxu0 0.0
      %688 = vmatpush1.msra.mxu0 %v643
      %689 = vmatprep.subr.mxu0 0.0
      %690 = vmatpush1.msra.mxu0 %v642
      %691 = vmatprep.subr.mxu0 0.0
      %692 = vmatpush1.msra.mxu0 %v641
      %693 = vmatprep.subr.mxu0 0.0
      %694 = vmatpush1.msra.mxu0 %v640
      %695 = vmatprep.subr.mxu0 0.0
      %696 = vmatpush1.msra.mxu0 %v639
      %697 = vmatprep.subr.mxu0 0.0
      %698 = vmatpush1.msra.mxu0 %v638
      %699 = vmatprep.subr.mxu0 0.0
      %700 = vmatpush2.msra.mxu0 0.0
      %701 = vmatprep.subr.mxu0 0.0
      %702 = vmatpush2.msra.mxu0 0.0
      %703 = vmatprep.subr.mxu0 0.0
      %704 = vmatpush2.msra.mxu0 0.0
      %705 = vmatprep.subr.mxu0 0.0
      %706 = vmatpush2.msra.mxu0 0.0
      %707 = vmatprep.subr.mxu0 0.0
      %708 = vmatpush2.msra.mxu0 0.0
      %709 = vmatprep.subr.mxu0 0.0
      %710 = vmatpush2.msra.mxu0 0.0
      %711 = vmatprep.subr.mxu0 0.0
      %712 = vmatpush2.msra.mxu0 0.0
      %713 = vmatprep.subr.mxu0 0.0
      %714 = vmatpush2.msra.mxu0 %v662
      %715 = vmatprep.subr.mxu0 0.0
      %716 = vmatpush2.msra.mxu0 %v661
      %717 = vmatprep.subr.mxu0 0.0
      %718 = vmatpush2.msra.mxu0 %v660
      %719 = vmatprep.subr.mxu0 0.0
      %720 = vmatpush2.msra.mxu0 %v659
      %721 = vmatprep.subr.mxu0 0.0
      %722 = vmatpush2.msra.mxu0 %v658
      %723 = vmatprep.subr.mxu0 0.0
      %724 = vmatpush2.msra.mxu0 %v657
      %725 = vmatprep.subr.mxu0 0.0
      %726 = vmatpush2.msra.mxu0 %v656
      %727 = vmatprep.subr.mxu0 0.0
      %728 = vmatpush2.msra.mxu0 %v655
      %729 = vmatprep.subr.mxu0 0.0
      %730 = vmatpush2.msra.mxu0 %v654
      %731 = vmatprep.mubr.f32.mxu0 %v665
      %732 = vmatmul.mubr.f32.gmra.mxu0 %v636
      %v733 = vpop.f32.mrf.mxu0
      %v734 = vadd.f32 0.0, %v733
      %v735 = vpop.f32.mrf.mxu0
      %736 = vdwg.mxu0
      %v737 = vadd.f32 %v635, %v734
      %738 = vst [vmem:[#allocation3] sm:$0xff] %v737
      %p739 = scmp.eq.s32.totalorder %s24, 4
      // Predicated region
      $region37: #{down_transition_forward.9} parent=31 // pred_check
        %p740 = pneg %p739
      $region38: #{down_transition_forward.9} parent=31 // pred_check_branch
        %742 = sbr.rel (%p740) target = $region40
      $region39: #{down_transition_forward.9} parent=31 // pred_region
        %v743 = vld [vmem:[#allocation3] sm:$0xff]
        %744 = vst [vmem:[%s317] sm:$0xff] %v743
        %v745 = vlaneseq
        %v746 = vand.u32 %v745, 127
        %vm747 = vcmp.lt.s32.totalorder %v746, 0
        %v748 = vsub.s32 0, %v746
        %v749 = vsel %vm747, %v748, %v746
        %v750 = vshrl.u32 %v749, 3
        %v751 = vand.u32 %v749, 7
        %v752 = vsub.s32 0, %v751
        %v753 = vsel %vm747, %v752, %v751
        %vm754 = vcmp.ne.s32.totalorder %v753, 0
        %vm755 = vcmp.lt.s32.totalorder %v753, 0
        %vm756 = vmand %vm755, %vm754
        %v757 = vadd.s32 %v753, 8
        %v758 = vsel %vm756, %v757, %v753
        %vm759 = vcmp.lt.s32.totalorder %v758, 4
        %vm760 = vcmp.lt.s32.totalorder %v746, 32
        %vm761 = vmand %vm759, %vm760
        %v762 = vsel %vm761, %v743, 0.0
        %763 = vadd.xlane.f32.xlu0 %v762
        %v764 = vpop.xlane.xlu0 %763
        %vm765 = vcmask 7168
        %766 = vst.msk [vmem:[%s325] sm:$0xff] %vm765, %v764
        %v767 = vmul.f32 %v762, %v762
        %768 = vadd.xlane.f32.xlu0 %v767
        %v769 = vpop.xlane.xlu0 %768
        %770 = vst.msk [vmem:[%s333] sm:$0xff] %vm765, %v769
      $region40: #{down_transition_forward.9} parent=31 // pred_fallthru
        _
      %p771 = scmp.lt.s32.totalorder %s22, 1
      %s772 = scalar_select %p771, %s22, 1
      %p773 = scmp.lt.s32.totalorder %s23, 3
      %s774 = scalar_select %p773, %s23, 3
      %s775 = smul.addr %s772, 4
      %s776 = sadd.s32 %s774, %s775
      %s777 = smul.addr %s776, 8
      %s778 = scalar_lea.vmem %s3, %s777
      %p779 = scmp.lt.s32.totalorder %s22, 1
      %s780 = scalar_select %p779, %s22, 1
      %p781 = scmp.lt.s32.totalorder %s23, 3
      %s782 = scalar_select %p781, %s23, 3
      %s783 = smul.addr %s780, 4
      %s784 = sadd.s32 %s782, %s783
      %s785 = smul.addr %s784, 8
      %s786 = scalar_lea.vmem %s4, %s785
      %p787 = scmp.lt.s32.totalorder %s22, 1
      %s788 = scalar_select %p787, %s22, 1
      %p789 = scmp.lt.s32.totalorder %s23, 3
      %s790 = scalar_select %p789, %s23, 3
      %s791 = smul.addr %s788, 4
      %s792 = sadd.s32 %s790, %s791
      %s793 = smul.addr %s792, 8
      %s794 = scalar_lea.vmem %s5, %s793
      // Predicated region
      $region41: #{down_transition_forward.9} parent=31 // pred_check
        %p795 = pneg %p133
      $region42: #{down_transition_forward.9} parent=31 // pred_check_branch
        %797 = sbr.rel (%p795) target = $region44
      $region43: #{down_transition_forward.9} parent=31 // pred_region
        _
      $region44: #{down_transition_forward.9} parent=31 // pred_fallthru
        _
      // Predicated region
      $region45: #{down_transition_forward.9} parent=31 // pred_check
        %p798 = pneg %p161
      $region46: #{down_transition_forward.9} parent=31 // pred_check_branch
        %800 = sbr.rel (%p798) target = $region48
      $region47: #{down_transition_forward.9} parent=31 // pred_region
        _
      $region48: #{down_transition_forward.9} parent=31 // pred_fallthru
        _
      // Predicated region
      $region49: #{down_transition_forward.9} parent=31 // pred_check
        %p801 = pneg %p189
      $region50: #{down_transition_forward.9} parent=31 // pred_check_branch
        %803 = sbr.rel (%p801) target = $region52
      $region51: #{down_transition_forward.9} parent=31 // pred_region
        _
      $region52: #{down_transition_forward.9} parent=31 // pred_fallthru
        _
    $region32: #{down_transition_forward.9} parent=5 // pred_fallthru
      _
    %p804 = scmp.le.s32.totalorder 2, %s12
    // Predicated region
    $region53: #{down_transition_forward.9} parent=5 // pred_check
      %p805 = pneg %p804
    $region54: #{down_transition_forward.9} parent=5 // pred_check_branch
      %807 = sbr.rel (%p805) target = $region56
    $region55: #{down_transition_forward.9} parent=5 // pred_region
      %s808 = ssub.s32 %s12, 2
      // Predicated region
      $region57: #{down_transition_forward.9} parent=55 // pred_check
        %p809 = pneg %p139
      $region58: #{down_transition_forward.9} parent=55 // pred_check_branch
        %811 = sbr.rel (%p809) target = $region60
      $region59: #{down_transition_forward.9} parent=55 // pred_region
        %p812 = scmp.lt.s32.totalorder %s25, 1
        %s813 = scalar_select %p812, %s25, 1
        %p814 = scmp.lt.s32.totalorder %s26, 3
        %s815 = scalar_select %p814, %s26, 3
        %s816 = smul.addr %s813, 4
        %s817 = sadd.s32 %s815, %s816
        %s818 = smul.addr %s817, 8
        %s819 = scalar_lea.vmem %s3, %s818
      $region60: #{down_transition_forward.9} parent=55 // pred_fallthru
        _
      // Predicated region
      $region61: #{down_transition_forward.9} parent=55 // pred_check
        %p820 = pneg %p167
      $region62: #{down_transition_forward.9} parent=55 // pred_check_branch
        %822 = sbr.rel (%p820) target = $region64
      $region63: #{down_transition_forward.9} parent=55 // pred_region
        %p823 = scmp.lt.s32.totalorder %s25, 1
        %s824 = scalar_select %p823, %s25, 1
        %p825 = scmp.lt.s32.totalorder %s26, 3
        %s826 = scalar_select %p825, %s26, 3
        %s827 = smul.addr %s824, 4
        %s828 = sadd.s32 %s826, %s827
        %s829 = smul.addr %s828, 8
        %s830 = scalar_lea.vmem %s4, %s829
      $region64: #{down_transition_forward.9} parent=55 // pred_fallthru
        _
      // Predicated region
      $region65: #{down_transition_forward.9} parent=55 // pred_check
        %p831 = pneg %p195
      $region66: #{down_transition_forward.9} parent=55 // pred_check_branch
        %833 = sbr.rel (%p831) target = $region68
      $region67: #{down_transition_forward.9} parent=55 // pred_region
        %p834 = scmp.lt.s32.totalorder %s25, 1
        %s835 = scalar_select %p834, %s25, 1
        %p836 = scmp.lt.s32.totalorder %s26, 3
        %s837 = scalar_select %p836, %s26, 3
        %s838 = smul.addr %s835, 4
        %s839 = sadd.s32 %s837, %s838
        %s840 = smul.addr %s839, 8
        %s841 = scalar_lea.vmem %s5, %s840
      $region68: #{down_transition_forward.9} parent=55 // pred_fallthru
        _
    $region56: #{down_transition_forward.9} parent=5 // pred_fallthru
      _
  $region6: #{down_transition_forward.9} parent=0 // loop_footer
    %s16 = sadd.s32 1, %s12
  $region7: #{down_transition_forward.9} parent=0 // loop_footer_branch
    %11 = sbr.rel target = $region3
  $region8: #{down_transition_forward.9} parent=0 // loop_exit
    _

// kernel: down_transition_forward.13
$region0: #{down_transition_forward.13}
  #allocation0 [shape = 'u32[]', space=smem, size = 0x4, offset = 0x4, fixed_abs, tag = 'smem constant byte address 0x4 - core index']
  #allocation1 [shape = 'u32[144,128]{1,0:T(1,128)}', space=vmem, size = 0x12000, scoped, tag = 'internal scratch']
  %s0 = inlined_call_operand.vmem [shape: f32[8,1024], index: 0, kind: input, shape index: {}]
  %s1 = inlined_call_operand.vmem [shape: f32[8,1024], index: 1, kind: input, shape index: {}]
  %s2 = inlined_call_operand.vmem [shape: f32[8,1024], index: 2, kind: output, shape index: {}]
  %s3 = sld [smem:[#allocation0]]
  $region18: #{down_transition_forward.13} parent=0
    _
  %s5 = ssub.s32 1, %s3
  %s6 = scalar_select 0, %s5, %s3
  // Predicated region
  $region2: #{down_transition_forward.13} parent=0 // pred_check
    _
  $region3: #{down_transition_forward.13} parent=0 // pred_check_branch
    %8 = sbr.rel (0) target = $region5
  $region4: #{down_transition_forward.13} parent=0 // pred_region
    _
  $region5: #{down_transition_forward.13} parent=0 // pred_fallthru
    _
  // Predicated region
  $region6: #{down_transition_forward.13} parent=0 // pred_check
    _
  $region7: #{down_transition_forward.13} parent=0 // pred_check_branch
    %10 = sbr.rel (0) target = $region9
  $region8: #{down_transition_forward.13} parent=0 // pred_region
    _
  $region9: #{down_transition_forward.13} parent=0 // pred_fallthru
    _
  %v11 = vld [vmem:[%s0] sm:$0xff]
  %v12 = vld [vmem:[%s0 + $0x8] sm:$0xff]
  %v13 = vld [vmem:[%s0 + $0x10] sm:$0xff]
  %v14 = vld [vmem:[%s0 + $0x18] sm:$0xff]
  %v15 = vld [vmem:[%s0 + $0x20] sm:$0xff]
  %v16 = vld [vmem:[%s0 + $0x28] sm:$0xff]
  %v17 = vld [vmem:[%s0 + $0x30] sm:$0xff]
  %v18 = vld [vmem:[%s0 + $0x38] sm:$0xff]
  %v19 = vld [vmem:[%s1] sm:$0xff]
  %v20 = vld [vmem:[%s1 + $0x8] sm:$0xff]
  %v21 = vld [vmem:[%s1 + $0x10] sm:$0xff]
  %v22 = vld [vmem:[%s1 + $0x18] sm:$0xff]
  %v23 = vld [vmem:[%s1 + $0x20] sm:$0xff]
  %v24 = vld [vmem:[%s1 + $0x28] sm:$0xff]
  %v25 = vld [vmem:[%s1 + $0x30] sm:$0xff]
  %v26 = vld [vmem:[%s1 + $0x38] sm:$0xff]
  %v27 = vadd.f32 %v11, %v19
  %v28 = vadd.f32 %v12, %v20
  %v29 = vadd.f32 %v13, %v21
  %v30 = vadd.f32 %v14, %v22
  %v31 = vadd.f32 %v15, %v23
  %v32 = vadd.f32 %v16, %v24
  %v33 = vadd.f32 %v17, %v25
  %v34 = vadd.f32 %v18, %v26
  %vm35 = vcmp.gt.f32.partialorder %v27, 0.0
  %vm36 = vcmp.gt.f32.partialorder %v28, 0.0
  %vm37 = vcmp.gt.f32.partialorder %v29, 0.0
  %vm38 = vcmp.gt.f32.partialorder %v30, 0.0
  %vm39 = vcmp.gt.f32.partialorder %v31, 0.0
  %vm40 = vcmp.gt.f32.partialorder %v32, 0.0
  %vm41 = vcmp.gt.f32.partialorder %v33, 0.0
  %vm42 = vcmp.gt.f32.partialorder %v34, 0.0
  %v43 = vmin.f32 %v27, 0.0
  %v44 = vmin.f32 %v28, 0.0
  %v45 = vmin.f32 %v29, 0.0
  %v46 = vmin.f32 %v30, 0.0
  %v47 = vmin.f32 %v31, 0.0
  %v48 = vmin.f32 %v32, 0.0
  %v49 = vmin.f32 %v33, 0.0
  %v50 = vmin.f32 %v34, 0.0
  %v51 = vmul.f32 %v43, 1.442695
  %v52 = vpow.pop %v51
  %v53 = vmul.f32 %v44, 1.442695
  %v54 = vpow.pop %v53
  %v55 = vmul.f32 %v45, 1.442695
  %v56 = vpow.pop %v55
  %v57 = vmul.f32 %v46, 1.442695
  %v58 = vpow.pop %v57
  %v59 = vmul.f32 %v47, 1.442695
  %v60 = vpow.pop %v59
  %v61 = vmul.f32 %v48, 1.442695
  %v62 = vpow.pop %v61
  %v63 = vmul.f32 %v49, 1.442695
  %v64 = vpow.pop %v63
  %v65 = vmul.f32 %v50, 1.442695
  %v66 = vpow.pop %v65
  %v67 = vsub.f32 %v52, 1.0
  %v68 = vsub.f32 %v54, 1.0
  %v69 = vsub.f32 %v56, 1.0
  %v70 = vsub.f32 %v58, 1.0
  %v71 = vsub.f32 %v60, 1.0
  %v72 = vsub.f32 %v62, 1.0
  %v73 = vsub.f32 %v64, 1.0
  %v74 = vsub.f32 %v66, 1.0
  %v75 = vsel %vm35, %v27, %v67
  %v76 = vsel %vm36, %v28, %v68
  %v77 = vsel %vm37, %v29, %v69
  %v78 = vsel %vm38, %v30, %v70
  %v79 = vsel %vm39, %v31, %v71
  %v80 = vsel %vm40, %v32, %v72
  %v81 = vsel %vm41, %v33, %v73
  %v82 = vsel %vm42, %v34, %v74
  %83 = vst [vmem:[%s2] sm:$0xff] %v75
  %84 = vst [vmem:[%s2 + $0x8] sm:$0xff] %v76
  %85 = vst [vmem:[%s2 + $0x10] sm:$0xff] %v77
  %86 = vst [vmem:[%s2 + $0x18] sm:$0xff] %v78
  %87 = vst [vmem:[%s2 + $0x20] sm:$0xff] %v79
  %88 = vst [vmem:[%s2 + $0x28] sm:$0xff] %v80
  %89 = vst [vmem:[%s2 + $0x30] sm:$0xff] %v81
  %90 = vst [vmem:[%s2 + $0x38] sm:$0xff] %v82
  // Predicated region
  $region10: #{down_transition_forward.13} parent=0 // pred_check
    _
  $region11: #{down_transition_forward.13} parent=0 // pred_check_branch
    %92 = sbr.rel (0) target = $region13
  $region12: #{down_transition_forward.13} parent=0 // pred_region
    _
  $region13: #{down_transition_forward.13} parent=0 // pred_fallthru
    _
  // Predicated region
  $region14: #{down_transition_forward.13} parent=0 // pred_check
    _
  $region15: #{down_transition_forward.13} parent=0 // pred_check_branch
    %94 = sbr.rel (0) target = $region17
  $region16: #{down_transition_forward.13} parent=0 // pred_region
    _
  $region17: #{down_transition_forward.13} parent=0 // pred_fallthru
    _

</llo_original>
